<compile_context>
chip_gen: v7x
topology: tpu7x:2x2x1
jax: 0.10.0
libtpu: 0.0.40
codegen_flags: <defaults>
</compile_context>

<pallas_src>
import functools
import numpy as np
import jax
import jax.numpy as jnp
from jax.experimental import pallas as pl
from jax.experimental.pallas import tpu as pltpu

NUM_SAMPLES = 16          # replaced conv1 in_channels
BN_EPS = 1e-5
# Review: do not pin 64 MiB (== entire physical VMEM per TC on v7x).
_VMEM_LIMIT = 32 * 1024 * 1024


def _rup(x, m):
    return ((x + m - 1) // m) * m


# ---------------------------------------------------------------------------
# Pallas kernels
# ---------------------------------------------------------------------------
def _mm_kernel(a_ref, b_ref, bias_ref, o_ref, acc_ref, *, relu):
    """Gridded matmul with K-reduction; epilogue = +bias (+ReLU)."""
    @pl.when(pl.program_id(2) == 0)
    def _init():
        acc_ref[...] = jnp.zeros_like(acc_ref)

    acc_ref[...] += jnp.dot(a_ref[...], b_ref[...],
                            preferred_element_type=jnp.float32)

    @pl.when(pl.program_id(2) == pl.num_programs(2) - 1)
    def _fini():
        out = acc_ref[...] + bias_ref[...]
        if relu:
            out = jnp.maximum(out, 0.0)
        o_ref[...] = out.astype(o_ref.dtype)


def _mm_res_kernel(a_ref, b_ref, bias_ref, res_ref, o_ref, acc_ref, *, relu):
    """Same as _mm_kernel but fuses the bottleneck residual add into the epilogue."""
    @pl.when(pl.program_id(2) == 0)
    def _init():
        acc_ref[...] = jnp.zeros_like(acc_ref)

    acc_ref[...] += jnp.dot(a_ref[...], b_ref[...],
                            preferred_element_type=jnp.float32)

    @pl.when(pl.program_id(2) == pl.num_programs(2) - 1)
    def _fini():
        out = acc_ref[...] + bias_ref[...] + res_ref[...].astype(jnp.float32)
        if relu:
            out = jnp.maximum(out, 0.0)
        o_ref[...] = out.astype(o_ref.dtype)


def _chain_kernel(x_ref, w1_ref, b1_ref, w2_ref, b2_ref, w3_ref, b3_ref,
                  o_ref, act_ref):
    """Fused chain of identical all-1x1 bottleneck blocks (no downsample).

    grid = (n_blocks,): per-step weights are streamed (double-buffered BlockSpec);
    the activation stays resident in the VMEM scratch `act_ref` across steps.
    """
    b = pl.program_id(0)

    @pl.when(b == 0)
    def _init():
        act_ref[...] = x_ref[...].astype(jnp.float32)

    x = act_ref[...]
    h = jnp.dot(x.astype(jnp.bfloat16), w1_ref[...],
                preferred_element_type=jnp.float32) + b1_ref[...]
    h = jnp.maximum(h, 0.0)
    h = jnp.dot(h.astype(jnp.bfloat16), w2_ref[...],
                preferred_element_type=jnp.float32) + b2_ref[...]
    h = jnp.maximum(h, 0.0)
    h = jnp.dot(h.astype(jnp.bfloat16), w3_ref[...],
                preferred_element_type=jnp.float32) + b3_ref[...]
    out = jnp.maximum(h + x, 0.0)
    act_ref[...] = out

    @pl.when(b == pl.num_programs(0) - 1)
    def _fini():
        o_ref[...] = out.astype(o_ref.dtype)


def _block_ds_kernel(x_ref, w1_ref, b1_ref, w2_ref, b2_ref, w3_ref, b3_ref,
                     wd_ref, bd_ref, o_ref):
    """One bottleneck block with downsample, all convs 1x1 (center-tap conv2)."""
    x = x_ref[...]
    h = jnp.maximum(jnp.dot(x, w1_ref[...],
                            preferred_element_type=jnp.float32) + b1_ref[...], 0.0)
    h = jnp.maximum(jnp.dot(h.astype(jnp.bfloat16), w2_ref[...],
                            preferred_element_type=jnp.float32) + b2_ref[...], 0.0)
    h = jnp.dot(h.astype(jnp.bfloat16), w3_ref[...],
                preferred_element_type=jnp.float32) + b3_ref[...]
    idn = jnp.dot(x, wd_ref[...],
                  preferred_element_type=jnp.float32) + bd_ref[...]
    o_ref[...] = jnp.maximum(h + idn, 0.0).astype(o_ref.dtype)


def _head_kernel(x_ref, w1_ref, b1_ref, w2_ref, b2_ref, w3_ref, b3_ref, o_ref):
    # fused fc -> fc2 -> fc3 chain (no nonlinearity between them, per the module)
    h = jnp.dot(x_ref[...], w1_ref[...],
                preferred_element_type=jnp.float32) + b1_ref[...]
    h = jnp.dot(h.astype(jnp.bfloat16), w2_ref[...],
                preferred_element_type=jnp.float32) + b2_ref[...]
    h = jnp.dot(h.astype(jnp.bfloat16), w3_ref[...],
                preferred_element_type=jnp.float32) + b3_ref[...]
    o_ref[...] = h


_VMEM_SPEC = pl.BlockSpec(memory_space=pltpu.MemorySpace.VMEM)


# ---------------------------------------------------------------------------
# Cached pallas_call builders (one Mosaic compile per unique tiling config)
# ---------------------------------------------------------------------------
@functools.lru_cache(maxsize=None)
def _mm_call(mp, kp, npad, tm, tk, tn, relu, has_res, out_dtype):
    grid = (mp // tm, npad // tn, kp // tk)
    in_specs = [
        pl.BlockSpec((tm, tk), lambda i, j, k: (i, k)),
        pl.BlockSpec((tk, tn), lambda i, j, k: (k, j)),
        pl.BlockSpec((1, tn), lambda i, j, k: (0, j)),
    ]
    if has_res:
        in_specs.append(pl.BlockSpec((tm, tn), lambda i, j, k: (i, j)))
        kern = functools.partial(_mm_res_kernel, relu=relu)
    else:
        kern = functools.partial(_mm_kernel, relu=relu)
    return pl.pallas_call(
        kern,
        out_shape=jax.ShapeDtypeStruct((mp, npad), out_dtype),
        grid=grid,
        in_specs=in_specs,
        out_specs=pl.BlockSpec((tm, tn), lambda i, j, k: (i, j)),
        scratch_shapes=[pltpu.VMEM((tm, tn), jnp.float32)],
        compiler_params=pltpu.CompilerParams(
            dimension_semantics=("parallel", "parallel", "arbitrary"),
            vmem_limit_bytes=_VMEM_LIMIT),
    )


@functools.lru_cache(maxsize=None)
def _chain_call(nb, mp, c, planes):
    def wspec(d0, d1):
        return pl.BlockSpec((None, d0, d1), lambda b: (b, 0, 0))
    return pl.pallas_call(
        _chain_kernel,
        out_shape=jax.ShapeDtypeStruct((mp, c), jnp.bfloat16),
        grid=(nb,),
        in_specs=[
            pl.BlockSpec((mp, c), lambda b: (0, 0)),     # x (used at step 0 only)
            wspec(c, planes), wspec(1, planes),          # w1, b1
            wspec(planes, planes), wspec(1, planes),     # w2 (center tap), b2
            wspec(planes, c), wspec(1, c),               # w3, b3
        ],
        out_specs=pl.BlockSpec((mp, c), lambda b: (0, 0)),
        scratch_shapes=[pltpu.VMEM((mp, c), jnp.float32)],
        compiler_params=pltpu.CompilerParams(
            dimension_semantics=("arbitrary",),          # sequential residual chain
            vmem_limit_bytes=_VMEM_LIMIT),
    )


@functools.lru_cache(maxsize=None)
def _block_ds_call(mp, cin, planes, cout):
    return pl.pallas_call(
        _block_ds_kernel,
        out_shape=jax.ShapeDtypeStruct((mp, cout), jnp.bfloat16),
        in_specs=[_VMEM_SPEC] * 9,
        out_specs=_VMEM_SPEC,
        compiler_params=pltpu.CompilerParams(vmem_limit_bytes=_VMEM_LIMIT),
    )


@functools.lru_cache(maxsize=None)
def _head_call(mp, n_out):
    return pl.pallas_call(
        _head_kernel,
        out_shape=jax.ShapeDtypeStruct((mp, n_out), jnp.float32),
        in_specs=[_VMEM_SPEC] * 7,
        out_specs=_VMEM_SPEC,
        compiler_params=pltpu.CompilerParams(vmem_limit_bytes=_VMEM_LIMIT),
    )


# ---------------------------------------------------------------------------
# Tiling selection + fused-matmul wrapper
# ---------------------------------------------------------------------------
def _pick_tiles(m, k, n):
    tm = min(_rup(m, 8), 256)
    mp = _rup(m, tm)
    # K: single full-K reduction step whenever it fits (always true in this net)
    # -> fewer grid steps + bigger weight DMAs (v5e/v6e review item).
    if k <= 2304:
        tk, kp = k, k
    else:
        tk = next((c for c in (2048, 1536, 1024, 512) if k % c == 0), 512)
        kp = _rup(k, tk)
    # N: lane-dense blocks; keep >=2 blocks along N for N>=256 so both v7x TCs
    # get work (N is the only parallel axis when M is tiny).
    if n % 128 == 0:
        if n % 512 == 0 and n >= 1024:
            tn = 512
        elif n % 256 == 0 and n >= 512:
            tn = 256
        else:
            tn = 128
        npad = n
    else:
        tn, npad = n, n                    # full-dim N block (64-ch layer1/stem)
    return tm, mp, tk, kp, tn, npad


def matmul_fused(a, b, bias, residual=None, relu=False, out_dtype=jnp.bfloat16):
    """a:(M,K), b:(K,N) bf16 weights, bias:(1,N)/(N,) f32; bias(+residual)(+ReLU) fused."""
    m, k = a.shape
    n = b.shape[1]
    tm, mp, tk, kp, tn, npad = _pick_tiles(m, k, n)

    a = a.astype(jnp.bfloat16)
    b = b.astype(jnp.bfloat16)
    if (mp, kp) != (m, k):
        a = jnp.pad(a, ((0, mp - m), (0, kp - k)))
    if kp != k:
        b = jnp.pad(b, ((0, kp - k), (0, 0)))
    bias2 = jnp.asarray(bias, jnp.float32).reshape(1, n)
    if npad != n:
        bias2 = jnp.pad(bias2, ((0, 0), (0, npad - n)))
        b = jnp.pad(b, ((0, 0), (0, npad - n)))

    args = [a, b, bias2]
    has_res = residual is not None
    if has_res:
        r = residual.astype(jnp.bfloat16)
        if r.shape != (mp, npad):
            r = jnp.pad(r, ((0, mp - r.shape[0]), (0, npad - r.shape[1])))
        args.append(r)

    out = _mm_call(mp, kp, npad, tm, tk, tn, bool(relu), has_res, out_dtype)(*args)
    if (mp, npad) != (m, n):
        out = out[:m, :n]
    return out


# ---------------------------------------------------------------------------
# Conv / pool / block / head wrappers (JAX glue around the Pallas kernels)
# ---------------------------------------------------------------------------
def conv1x1(x, w2, bias, stride=1, residual=None, relu=True):
    """1x1 conv (also used for center-tap 3x3): reshape + gridded matmul."""
    if stride != 1:
        x = x[:, ::stride, ::stride, :]
    n, h, w, cin = x.shape
    a = x.reshape(n * h * w, cin)
    r = residual.reshape(n * h * w, -1) if residual is not None else None
    out = matmul_fused(a, w2, bias, residual=r, relu=relu)
    return out.reshape(n, h, w, -1)


def conv_spatial(x, w2, bias, kh, kw, stride, padding, relu=True):
    """kxk conv via tap-major im2col (lane-dense concat) + gridded matmul."""
    # TODO(synk): im2col patches are still materialized in HBM; true in-kernel
    # patch extraction (manual DMA of shifted windows) is not implemented here.
    n, h, wdim, cin = x.shape
    hout = (h + 2 * padding - kh) // stride + 1
    wout = (wdim + 2 * padding - kw) // stride + 1
    xp = jnp.pad(x, ((0, 0), (padding, padding), (padding, padding), (0, 0)))
    cols = []
    for ki in range(kh):
        for kj in range(kw):
            cols.append(xp[:, ki:ki + stride * (hout - 1) + 1:stride,
                           kj:kj + stride * (wout - 1) + 1:stride, :])
    patches = jnp.concatenate(cols, axis=-1)            # (N,Ho,Wo, kh*kw*Cin) tap-major
    a = patches.reshape(n * hout * wout, cin * kh * kw)
    out = matmul_fused(a, w2, bias, relu=relu)
    return out.reshape(n, hout, wout, -1)


def maxpool_3x3_s2_p1(x):
    # Per review: output is only 2x4x4x64 -> a plain XLA max over the 9 taps is
    # cheaper than a dedicated launch + (9,M,C) HBM materialization.
    n, h, w, c = x.shape
    hout = (h + 2 - 3) // 2 + 1
    wout = (w + 2 - 3) // 2 + 1
    xp = jnp.pad(x, ((0, 0), (1, 1), (1, 1), (0, 0)), constant_values=-jnp.inf)
    out = None
    for ki in range(3):
        for kj in range(3):
            tap = xp[:, ki:ki + 2 * (hout - 1) + 1:2,
                     kj:kj + 2 * (wout - 1) + 1:2, :]
            out = tap if out is None else jnp.maximum(out, tap)
    return out


def _bottleneck_generic(x, blk):
    out = conv1x1(x, blk["w1"], blk["b1"], relu=True)                       # conv1+bn1+relu
    if blk["conv2_center"]:
        out = conv1x1(out, blk["w2"], blk["b2"], stride=blk["stride"], relu=True)
    else:
        out = conv_spatial(out, blk["w2"], blk["b2"], 3, 3, blk["stride"], 1,
                           relu=True)                                       # conv2+bn2+relu
    if "wd" in blk:
        identity = conv1x1(x, blk["wd"], blk["bd"],
                           stride=blk["stride"], relu=False)                # downsample+bn
    else:
        identity = x
    # conv3 + bn3 + residual add + relu fused into one matmul epilogue
    return conv1x1(out, blk["w3"], blk["b3"], residual=identity, relu=True)


def _bottleneck_fused1x1(x, blk):
    """Whole bottleneck (conv1/center-tap conv2/conv3 + downsample + relu) in ONE call.

    Valid because all convs act on 1x1 spatial maps (stride is a spatial no-op).
    """
    n, h, w, cin = x.shape
    m = n * h * w
    mp = _rup(m, 8)
    a = x.reshape(m, cin).astype(jnp.bfloat16)
    if mp != m:
        a = jnp.pad(a, ((0, mp - m), (0, 0)))
    planes = blk["w1"].shape[1]
    cout = blk["w3"].shape[1]
    out = _block_ds_call(mp, cin, planes, cout)(
        a, blk["w1"], blk["b1"], blk["w2"], blk["b2"],
        blk["w3"], blk["b3"], blk["wd"], blk["bd"])
    return out[:m].reshape(n, h, w, cout)


def _chain_forward(x, chain):
    """Run a stacked run of identical all-1x1 bottleneck blocks in one pallas_call."""
    n, h, w, c = x.shape
    m = n * h * w
    mp = _rup(m, 8)
    a = x.reshape(m, c).astype(jnp.bfloat16)
    if mp != m:
        a = jnp.pad(a, ((0, mp - m), (0, 0)))
    nb, _, planes = chain["w1"].shape
    out = _chain_call(nb, mp, c, planes)(
        a, chain["w1"], chain["b1"], chain["w2"], chain["b2"],
        chain["w3"], chain["b3"])
    return out[:m].reshape(n, h, w, c)


def head_forward(params, feat):
    """Fused fc -> fc2 -> fc3 in a single pallas_call."""
    n = feat.shape[0]
    mp = _rup(n, 8)
    x = feat.astype(jnp.bfloat16)
    if mp != n:
        x = jnp.pad(x, ((0, mp - n), (0, 0)))
    out = _head_call(mp, params["fc3_w"].shape[1])(
        x, params["fc_w"], params["fc_b"],
        params["fc2_w"], params["fc2_b"],
        params["fc3_w"], params["fc3_b"])
    return out[:n, :1]


# ---------------------------------------------------------------------------
# Parameter construction (deterministic, synthetic — BN folded, weights pre-laid out)
# ---------------------------------------------------------------------------
def _conv_init(key, cout, cin, kh, kw):
    fan_in = cin * kh * kw
    return jax.random.normal(key, (cout, cin, kh, kw), jnp.float32) * np.sqrt(1.0 / fan_in)


def _bn_scale_shift(c):
    # TODO(synk): BatchNorm is eval-mode with PyTorch default running stats
    # (gamma=1, beta=0, mean=0, var=1); real checkpoints would fold their stats here.
    scale = jnp.ones((c,), jnp.float32) / jnp.sqrt(1.0 + BN_EPS)
    shift = jnp.zeros((c,), jnp.float32)
    return scale, shift


def _fold_conv_bn(w, b, cout, center_only=False):
    """Fold eval-mode BN into the conv.

    center_only: keep only the center tap (exact for 3x3/pad=1 convs applied to
    1x1 spatial maps) -> (Cin, Cout).  Otherwise tap-major (kh*kw*Cin, Cout),
    matching the concat-based im2col layout.
    """
    scale, shift = _bn_scale_shift(cout)
    w_f = w * scale[:, None, None, None]
    b0 = b if b is not None else jnp.zeros((cout,), jnp.float32)
    b_f = b0 * scale + shift
    _, cin, kh, kw = w.shape
    if center_only:
        w2 = w_f[:, :, kh // 2, kw // 2].T                      # (Cin, Cout)
    else:
        w2 = jnp.transpose(w_f, (2, 3, 1, 0)).reshape(kh * kw * cin, cout)
    return w2.astype(jnp.bfloat16), b_f.reshape(1, cout).astype(jnp.float32)


def build_params(seed=0, input_hw=(16, 16)):
    keys = iter(jax.random.split(jax.random.PRNGKey(seed), 1024))
    nk = lambda: next(keys)
    p = {}
    # replaced stem conv: Conv2d(16, 64, k=7, s=2, pad=3, bias=True) + bn1 folded
    w = _conv_init(nk(), 64, NUM_SAMPLES, 7, 7)
    b = jax.random.normal(nk(), (64,), jnp.float32) * 0.01
    p["stem_w"], p["stem_b"] = _fold_conv_bn(w, b, 64)

    # spatial-size trace (to detect blocks whose 3x3 conv sees a 1x1 map)
    h, wdim = input_hw
    h = (h + 6 - 7) // 2 + 1
    wdim = (wdim + 6 - 7) // 2 + 1
    h = (h + 2 - 3) // 2 + 1
    wdim = (wdim + 2 - 3) // 2 + 1

    inplanes = 64
    layers = []
    for planes, nblocks, stride in zip((64, 128, 256, 512), (3, 8, 36, 3), (1, 2, 2, 2)):
        pre, chain_blks = [], []
        for bi in range(nblocks):
            s = stride if bi == 0 else 1
            center = (h == 1 and wdim == 1)          # conv2 input spatial == block input
            has_ds = (s != 1 or inplanes != planes * 4)
            blk = {"stride": s, "conv2_center": bool(center)}
            blk["w1"], blk["b1"] = _fold_conv_bn(
                _conv_init(nk(), planes, inplanes, 1, 1), None, planes)
            blk["w2"], blk["b2"] = _fold_conv_bn(
                _conv_init(nk(), planes, planes, 3, 3), None, planes, center_only=center)
            blk["w3"], blk["b3"] = _fold_conv_bn(
                _conv_init(nk(), planes * 4, planes, 1, 1), None, planes * 4)
            if has_ds:
                blk["wd"], blk["bd"] = _fold_conv_bn(
                    _conv_init(nk(), planes * 4, inplanes, 1, 1), None, planes * 4)

            if center and not has_ds:
                chain_blks.append(blk)               # fully-1x1, no downsample -> chain
            else:
                if chain_blks:                        # keep block ordering if geometry odd
                    for cb in chain_blks:
                        cb["kind"] = "generic"
                    pre.extend(chain_blks)
                    chain_blks = []
                blk["kind"] = "fused1x1" if (center and has_ds) else "generic"
                pre.append(blk)

            inplanes = planes * 4
            h = (h + 2 - 3) // s + 1
            wdim = (wdim + 2 - 3) // s + 1
        chain = None
        if chain_blks:
            chain = {k: jnp.stack([cb[k] for cb in chain_blks])
                     for k in ("w1", "b1", "w2", "b2", "w3", "b3")}
        layers.append({"pre": pre, "chain": chain})
    p["layers"] = layers

    # head: pre-transposed, lane-aligned padded (1000->1024, 1->128), bf16 weights
    fc_w = jax.random.normal(nk(), (1000, 2048), jnp.float32) / np.sqrt(2048.0)
    fc_b = jax.random.normal(nk(), (1000,), jnp.float32) * 0.01
    fc2_w = jax.random.normal(nk(), (512, 1000), jnp.float32) / np.sqrt(1000.0)
    fc2_b = jax.random.normal(nk(), (512,), jnp.float32) * 0.01
    fc3_w = jax.random.normal(nk(), (1, 512), jnp.float32) / np.sqrt(512.0)
    fc3_b = jax.random.normal(nk(), (1,), jnp.float32) * 0.01

    n1p = _rup(1000, 128)          # 1024
    p["fc_w"] = jnp.zeros((2048, n1p), jnp.float32).at[:, :1000].set(fc_w.T).astype(jnp.bfloat16)
    p["fc_b"] = jnp.zeros((1, n1p), jnp.float32).at[0, :1000].set(fc_b)
    p["fc2_w"] = jnp.zeros((n1p, 512), jnp.float32).at[:1000, :].set(fc2_w.T).astype(jnp.bfloat16)
    p["fc2_b"] = fc2_b.reshape(1, 512)
    p["fc3_w"] = jnp.zeros((512, 128), jnp.float32).at[:, :1].set(fc3_w.T).astype(jnp.bfloat16)
    p["fc3_b"] = jnp.zeros((1, 128), jnp.float32).at[0, :1].set(fc3_b)
    return p


# ---------------------------------------------------------------------------
# Forward pass (ResNet-152 bottleneck stack + fc2 + fc3)
# ---------------------------------------------------------------------------
def mresnet_forward(params, x_nchw):
    x = jnp.transpose(x_nchw, (0, 2, 3, 1)).astype(jnp.bfloat16)            # NCHW -> NHWC
    x = conv_spatial(x, params["stem_w"], params["stem_b"], 7, 7, 2, 3, relu=True)
    x = maxpool_3x3_s2_p1(x)
    for layer in params["layers"]:
        for blk in layer["pre"]:
            if blk["kind"] == "fused1x1":
                x = _bottleneck_fused1x1(x, blk)
            else:
                x = _bottleneck_generic(x, blk)
        if layer["chain"] is not None:
            x = _chain_forward(x, layer["chain"])
    feat = jnp.mean(x.astype(jnp.float32), axis=(1, 2))                     # adaptive avg pool
    return head_forward(params, feat)                                       # fc -> fc2 -> fc3


# ---------------------------------------------------------------------------
if __name__ == "__main__":
    params = build_params(seed=0, input_hw=(16, 16))
    x = jax.random.normal(jax.random.PRNGKey(0), (2, NUM_SAMPLES, 16, 16), jnp.float32)
    out = mresnet_forward(params, x)
    out = jax.block_until_ready(out)
    assert out.shape == (2, 1)
    assert bool(jnp.all(jnp.isfinite(out)))
    print("KERNEL_OK")
</pallas_src>

<mosaic_0001>
module attributes {stable_mosaic.version = 11 : i64} {
  func.func @_mm_kernel(%arg0: i32, %arg1: i32, %arg2: i32, %arg3: memref<128x784xbf16, #tpu.memory_space<vmem>>, %arg4: memref<784x64xbf16, #tpu.memory_space<vmem>>, %arg5: memref<1x64xf32, #tpu.memory_space<vmem>>, %arg6: memref<128x64xbf16, #tpu.memory_space<vmem>>, %arg7: memref<128x64xf32, #tpu.memory_space<vmem>>) attributes {dimension_semantics = [#tpu.dimension_semantics<parallel>, #tpu.dimension_semantics<parallel>, #tpu.dimension_semantics<arbitrary>], iteration_bounds = array<i64: 1, 1, 1>, scalar_prefetch = 0 : i64, scratch_operands = 1 : i64, tpu.core_type = #tpu.core_type<tc>, window_params = [{transform_indices = @transform_0, window_bounds = array<i64: 128, 784>}, {transform_indices = @transform_1, window_bounds = array<i64: 784, 64>}, {transform_indices = @transform_2, window_bounds = array<i64: 1, 64>}, {transform_indices = @transform_3, window_bounds = array<i64: 128, 64>}]} {
    %c0_i32 = arith.constant 0 : i32
    %0 = arith.cmpi eq, %arg2, %c0_i32 : i32
    %1 = arith.extui %0 : i1 to i32
    %c0_i32_0 = arith.constant 0 : i32
    %2 = arith.cmpi ne, %1, %c0_i32_0 : i32
    scf.if %2 {
      %cst_10 = arith.constant 0.000000e+00 : f32
      %12 = vector.broadcast %cst_10 : f32 to vector<128x64xf32>
      %c0_11 = arith.constant 0 : index
      %c0_12 = arith.constant 0 : index
      %13 = vector.load %arg7[%c0_11, %c0_12] : memref<128x64xf32, #tpu.memory_space<vmem>>, vector<128x64xf32>
      tpu.vector_store %arg7[%c0_11, %c0_12], %12 {strides = array<i32>} : memref<128x64xf32, #tpu.memory_space<vmem>>, vector<128x64xf32>,
    } else {
    }
    %c0 = arith.constant 0 : index
    %c0_1 = arith.constant 0 : index
    %3 = vector.load %arg7[%c0, %c0_1] : memref<128x64xf32, #tpu.memory_space<vmem>>, vector<128x64xf32>
    %c0_2 = arith.constant 0 : index
    %c0_3 = arith.constant 0 : index
    %4 = vector.load %arg3[%c0_2, %c0_3] : memref<128x784xbf16, #tpu.memory_space<vmem>>, vector<128x784xbf16>
    %c0_4 = arith.constant 0 : index
    %c0_5 = arith.constant 0 : index
    %5 = vector.load %arg4[%c0_4, %c0_5] : memref<784x64xbf16, #tpu.memory_space<vmem>>, vector<784x64xbf16>
    %cst = arith.constant dense<0.000000e+00> : vector<128x64xf32>
    %6 = tpu.matmul %4, %5, %cst {dimension_numbers = #tpu.dot_dimension_numbers<[1], [0], [0], [1], [0, 0, 1, 1], [], []>} : vector<128x784xbf16>, vector<784x64xbf16>, vector<128x64xf32> -> vector<128x64xf32>
    %7 = arith.addf %3, %6 : vector<128x64xf32>
    %c0_6 = arith.constant 0 : index
    %c0_7 = arith.constant 0 : index
    %8 = vector.load %arg7[%c0_6, %c0_7] : memref<128x64xf32, #tpu.memory_space<vmem>>, vector<128x64xf32>
    tpu.vector_store %arg7[%c0_6, %c0_7], %7 {strides = array<i32>} : memref<128x64xf32, #tpu.memory_space<vmem>>, vector<128x64xf32>,
    %c0_i32_8 = arith.constant 0 : i32
    %9 = arith.cmpi eq, %arg2, %c0_i32_8 : i32
    %10 = arith.extui %9 : i1 to i32
    %c0_i32_9 = arith.constant 0 : i32
    %11 = arith.cmpi ne, %10, %c0_i32_9 : i32
    scf.if %11 {
      %c0_10 = arith.constant 0 : index
      %c0_11 = arith.constant 0 : index
      %12 = vector.load %arg7[%c0_10, %c0_11] : memref<128x64xf32, #tpu.memory_space<vmem>>, vector<128x64xf32>
      %c0_12 = arith.constant 0 : index
      %c0_13 = arith.constant 0 : index
      %13 = vector.load %arg5[%c0_12, %c0_13] : memref<1x64xf32, #tpu.memory_space<vmem>>, vector<1x64xf32>
      %14 = vector.broadcast %13 : vector<1x64xf32> to vector<128x64xf32>
      %15 = arith.addf %12, %14 : vector<128x64xf32>
      %cst_14 = arith.constant 0.000000e+00 : f32
      %16 = vector.broadcast %cst_14 : f32 to vector<128x64xf32>
      %17 = arith.maximumf %15, %16 : vector<128x64xf32>
      %18 = arith.truncf %17 : vector<128x64xf32> to vector<128x64xbf16>
      %c0_15 = arith.constant 0 : index
      %c0_16 = arith.constant 0 : index
      %19 = vector.load %arg6[%c0_15, %c0_16] : memref<128x64xbf16, #tpu.memory_space<vmem>>, vector<128x64xbf16>
      tpu.vector_store %arg6[%c0_15, %c0_16], %18 {strides = array<i32>} : memref<128x64xbf16, #tpu.memory_space<vmem>>, vector<128x64xbf16>,
    } else {
    }
    return
  }
  func.func @transform_0(%arg0: i32, %arg1: i32, %arg2: i32) -> (i32, i32) {
    %c0_i32 = arith.constant 0 : i32
    return %arg0, %arg2 : i32, i32
  }
  func.func @transform_1(%arg0: i32, %arg1: i32, %arg2: i32) -> (i32, i32) {
    %c0_i32 = arith.constant 0 : i32
    return %arg2, %arg1 : i32, i32
  }
  func.func @transform_2(%arg0: i32, %arg1: i32, %arg2: i32) -> (i32, i32) {
    %c0_i32 = arith.constant 0 : i32
    %c0_i32_0 = arith.constant 0 : i32
    return %c0_i32, %arg1 : i32, i32
  }
  func.func @transform_3(%arg0: i32, %arg1: i32, %arg2: i32) -> (i32, i32) {
    %c0_i32 = arith.constant 0 : i32
    return %arg0, %arg1 : i32, i32
  }
}

</mosaic_0001>

<llo_original>
// kernel: tpu_custom_call.1
$region0: #{tpu_custom_call.1}
  #allocation0 [shape = 'u32[]', space=smem, size = 0x4, offset = 0x4, fixed_abs, tag = 'smem constant byte address 0x4 - core index']
  #allocation1 [shape = 'u32[144,128]{1,0:T(1,128)}', space=vmem, size = 0x12000, scoped, tag = 'internal scratch']
  #allocation2 [shape = 'f32[128,64]{1,0:T(8,128)}', space=vmem, size = 0x10000, scoped, tag = 'scratch operand']
  %s0 = inlined_call_operand.vmem [shape: bf16[128,784], index: 0, kind: input, shape index: {}]
  %s1 = inlined_call_operand.vmem [shape: bf16[784,64], index: 1, kind: input, shape index: {}]
  %s2 = inlined_call_operand.vmem [shape: f32[1,64], index: 2, kind: input, shape index: {}]
  %s3 = inlined_call_operand.vmem [shape: bf16[128,64], index: 3, kind: output, shape index: {}]
  %s4 = sld [smem:[#allocation0]]
  $region30: #{tpu_custom_call.1} parent=0
    _
  %s6 = ssub.s32 1, %s4
  %s7 = scalar_select 0, %s6, %s4
  // Predicated region
  $region2: #{tpu_custom_call.1} parent=0 // pred_check
    _
  $region3: #{tpu_custom_call.1} parent=0 // pred_check_branch
    %9 = sbr.rel (0) target = $region5
  $region4: #{tpu_custom_call.1} parent=0 // pred_region
    _
  $region5: #{tpu_custom_call.1} parent=0 // pred_fallthru
    _
  // Predicated region
  $region6: #{tpu_custom_call.1} parent=0 // pred_check
    _
  $region7: #{tpu_custom_call.1} parent=0 // pred_check_branch
    %11 = sbr.rel (0) target = $region9
  $region8: #{tpu_custom_call.1} parent=0 // pred_region
    _
  $region9: #{tpu_custom_call.1} parent=0 // pred_fallthru
    _
  // Predicated region
  $region10: #{tpu_custom_call.1} parent=0 // pred_check
    _
  $region11: #{tpu_custom_call.1} parent=0 // pred_check_branch
    %13 = sbr.rel (0) target = $region13
  $region12: #{tpu_custom_call.1} parent=0 // pred_region
    _
  $region13: #{tpu_custom_call.1} parent=0 // pred_fallthru
    _
  %p15 = scmp.eq.s32.totalorder 0, 0
  // Predicated region
  $region14: #{tpu_custom_call.1} parent=0 // pred_check
    %p16 = pneg %p15
  $region15: #{tpu_custom_call.1} parent=0 // pred_check_branch
    %18 = sbr.rel (%p16) target = $region17
  $region16: #{tpu_custom_call.1} parent=0 // pred_region
    %vm19 = vcmask 523264
    %20 = vst.msk [vmem:[#allocation2] sm:$0xff] %vm19, 0.0
    %21 = vst.msk [vmem:[#allocation2 + $0x8] sm:$0xff] %vm19, 0.0
    %22 = vst.msk [vmem:[#allocation2 + $0x10] sm:$0xff] %vm19, 0.0
    %23 = vst.msk [vmem:[#allocation2 + $0x18] sm:$0xff] %vm19, 0.0
    %24 = vst.msk [vmem:[#allocation2 + $0x20] sm:$0xff] %vm19, 0.0
    %25 = vst.msk [vmem:[#allocation2 + $0x28] sm:$0xff] %vm19, 0.0
    %26 = vst.msk [vmem:[#allocation2 + $0x30] sm:$0xff] %vm19, 0.0
    %27 = vst.msk [vmem:[#allocation2 + $0x38] sm:$0xff] %vm19, 0.0
    %28 = vst.msk [vmem:[#allocation2 + $0x40] sm:$0xff] %vm19, 0.0
    %29 = vst.msk [vmem:[#allocation2 + $0x48] sm:$0xff] %vm19, 0.0
    %30 = vst.msk [vmem:[#allocation2 + $0x50] sm:$0xff] %vm19, 0.0
    %31 = vst.msk [vmem:[#allocation2 + $0x58] sm:$0xff] %vm19, 0.0
    %32 = vst.msk [vmem:[#allocation2 + $0x60] sm:$0xff] %vm19, 0.0
    %33 = vst.msk [vmem:[#allocation2 + $0x68] sm:$0xff] %vm19, 0.0
    %34 = vst.msk [vmem:[#allocation2 + $0x70] sm:$0xff] %vm19, 0.0
    %35 = vst.msk [vmem:[#allocation2 + $0x78] sm:$0xff] %vm19, 0.0
  $region17: #{tpu_custom_call.1} parent=0 // pred_fallthru
    _
  %v36 = vld [vmem:[#allocation2] sm:$0xff]
  %v37 = vld [vmem:[#allocation2 + $0x8] sm:$0xff]
  %v38 = vld [vmem:[#allocation2 + $0x10] sm:$0xff]
  %v39 = vld [vmem:[#allocation2 + $0x18] sm:$0xff]
  %v40 = vld [vmem:[#allocation2 + $0x20] sm:$0xff]
  %v41 = vld [vmem:[#allocation2 + $0x28] sm:$0xff]
  %v42 = vld [vmem:[#allocation2 + $0x30] sm:$0xff]
  %v43 = vld [vmem:[#allocation2 + $0x38] sm:$0xff]
  %v44 = vld [vmem:[#allocation2 + $0x40] sm:$0xff]
  %v45 = vld [vmem:[#allocation2 + $0x48] sm:$0xff]
  %v46 = vld [vmem:[#allocation2 + $0x50] sm:$0xff]
  %v47 = vld [vmem:[#allocation2 + $0x58] sm:$0xff]
  %v48 = vld [vmem:[#allocation2 + $0x60] sm:$0xff]
  %v49 = vld [vmem:[#allocation2 + $0x68] sm:$0xff]
  %v50 = vld [vmem:[#allocation2 + $0x70] sm:$0xff]
  %v51 = vld [vmem:[#allocation2 + $0x78] sm:$0xff]
  %v52 = vld [vmem:[%s0] sm:$0xff]
  %v53 = vld [vmem:[%s0 + $0x8] sm:$0xff]
  %v54 = vld [vmem:[%s0 + $0x10] sm:$0xff]
  %v55 = vld [vmem:[%s0 + $0x18] sm:$0xf]
  %v56 = vld [vmem:[%s0 + $0x1c] sm:$0xff]
  %v57 = vld [vmem:[%s0 + $0x24] sm:$0xff]
  %v58 = vld [vmem:[%s0 + $0x2c] sm:$0xff]
  %v59 = vld [vmem:[%s0 + $0x34] sm:$0xf]
  %v60 = vld [vmem:[%s0 + $0x38] sm:$0xff]
  %v61 = vld [vmem:[%s0 + $0x40] sm:$0xff]
  %v62 = vld [vmem:[%s0 + $0x48] sm:$0xff]
  %v63 = vld [vmem:[%s0 + $0x50] sm:$0xf]
  %v64 = vld [vmem:[%s0 + $0x54] sm:$0xff]
  %v65 = vld [vmem:[%s0 + $0x5c] sm:$0xff]
  %v66 = vld [vmem:[%s0 + $0x64] sm:$0xff]
  %v67 = vld [vmem:[%s0 + $0x6c] sm:$0xf]
  %v68 = vld [vmem:[%s0 + $0x70] sm:$0xff]
  %v69 = vld [vmem:[%s0 + $0x78] sm:$0xff]
  %v70 = vld [vmem:[%s0 + $0x80] sm:$0xff]
  %v71 = vld [vmem:[%s0 + $0x88] sm:$0xf]
  %v72 = vld [vmem:[%s0 + $0x8c] sm:$0xff]
  %v73 = vld [vmem:[%s0 + $0x94] sm:$0xff]
  %v74 = vld [vmem:[%s0 + $0x9c] sm:$0xff]
  %v75 = vld [vmem:[%s0 + $0xa4] sm:$0xf]
  %v76 = vld [vmem:[%s0 + $0xa8] sm:$0xff]
  %v77 = vld [vmem:[%s0 + $0xb0] sm:$0xff]
  %v78 = vld [vmem:[%s0 + $0xb8] sm:$0xff]
  %v79 = vld [vmem:[%s0 + $0xc0] sm:$0xf]
  %v80 = vld [vmem:[%s0 + $0xc4] sm:$0xff]
  %v81 = vld [vmem:[%s0 + $0xcc] sm:$0xff]
  %v82 = vld [vmem:[%s0 + $0xd4] sm:$0xff]
  %v83 = vld [vmem:[%s0 + $0xdc] sm:$0xf]
  %v84 = vld [vmem:[%s0 + $0xe0] sm:$0xff]
  %v85 = vld [vmem:[%s0 + $0xe8] sm:$0xff]
  %v86 = vld [vmem:[%s0 + $0xf0] sm:$0xff]
  %v87 = vld [vmem:[%s0 + $0xf8] sm:$0xf]
  %v88 = vld [vmem:[%s0 + $0xfc] sm:$0xff]
  %v89 = vld [vmem:[%s0 + $0x104] sm:$0xff]
  %v90 = vld [vmem:[%s0 + $0x10c] sm:$0xff]
  %v91 = vld [vmem:[%s0 + $0x114] sm:$0xf]
  %v92 = vld [vmem:[%s0 + $0x118] sm:$0xff]
  %v93 = vld [vmem:[%s0 + $0x120] sm:$0xff]
  %v94 = vld [vmem:[%s0 + $0x128] sm:$0xff]
  %v95 = vld [vmem:[%s0 + $0x130] sm:$0xf]
  %v96 = vld [vmem:[%s0 + $0x134] sm:$0xff]
  %v97 = vld [vmem:[%s0 + $0x13c] sm:$0xff]
  %v98 = vld [vmem:[%s0 + $0x144] sm:$0xff]
  %v99 = vld [vmem:[%s0 + $0x14c] sm:$0xf]
  %v100 = vld [vmem:[%s0 + $0x150] sm:$0xff]
  %v101 = vld [vmem:[%s0 + $0x158] sm:$0xff]
  %v102 = vld [vmem:[%s0 + $0x160] sm:$0xff]
  %v103 = vld [vmem:[%s0 + $0x168] sm:$0xf]
  %v104 = vld [vmem:[%s0 + $0x16c] sm:$0xff]
  %v105 = vld [vmem:[%s0 + $0x174] sm:$0xff]
  %v106 = vld [vmem:[%s0 + $0x17c] sm:$0xff]
  %v107 = vld [vmem:[%s0 + $0x184] sm:$0xf]
  %v108 = vld [vmem:[%s0 + $0x188] sm:$0xff]
  %v109 = vld [vmem:[%s0 + $0x190] sm:$0xff]
  %v110 = vld [vmem:[%s0 + $0x198] sm:$0xff]
  %v111 = vld [vmem:[%s0 + $0x1a0] sm:$0xf]
  %v112 = vld [vmem:[%s0 + $0x1a4] sm:$0xff]
  %v113 = vld [vmem:[%s0 + $0x1ac] sm:$0xff]
  %v114 = vld [vmem:[%s0 + $0x1b4] sm:$0xff]
  %v115 = vld [vmem:[%s0 + $0x1bc] sm:$0xf]
  %v116 = vld [vmem:[%s1] sm:$0xf]
  %v117 = vld [vmem:[%s1 + $0x4] sm:$0xf]
  %v118 = vld [vmem:[%s1 + $0x8] sm:$0xf]
  %v119 = vld [vmem:[%s1 + $0xc] sm:$0xf]
  %v120 = vld [vmem:[%s1 + $0x10] sm:$0xf]
  %v121 = vld [vmem:[%s1 + $0x14] sm:$0xf]
  %v122 = vld [vmem:[%s1 + $0x18] sm:$0xf]
  %v123 = vld [vmem:[%s1 + $0x1c] sm:$0xf]
  %v124 = vld [vmem:[%s1 + $0x20] sm:$0xf]
  %v125 = vld [vmem:[%s1 + $0x24] sm:$0xf]
  %v126 = vld [vmem:[%s1 + $0x28] sm:$0xf]
  %v127 = vld [vmem:[%s1 + $0x2c] sm:$0xf]
  %v128 = vld [vmem:[%s1 + $0x30] sm:$0xf]
  %v129 = vld [vmem:[%s1 + $0x34] sm:$0xf]
  %v130 = vld [vmem:[%s1 + $0x38] sm:$0xf]
  %v131 = vld [vmem:[%s1 + $0x3c] sm:$0xf]
  %v132 = vld [vmem:[%s1 + $0x40] sm:$0xf]
  %v133 = vld [vmem:[%s1 + $0x44] sm:$0xf]
  %v134 = vld [vmem:[%s1 + $0x48] sm:$0xf]
  %v135 = vld [vmem:[%s1 + $0x4c] sm:$0xf]
  %v136 = vld [vmem:[%s1 + $0x50] sm:$0xf]
  %v137 = vld [vmem:[%s1 + $0x54] sm:$0xf]
  %v138 = vld [vmem:[%s1 + $0x58] sm:$0xf]
  %v139 = vld [vmem:[%s1 + $0x5c] sm:$0xf]
  %v140 = vld [vmem:[%s1 + $0x60] sm:$0xf]
  %v141 = vld [vmem:[%s1 + $0x64] sm:$0xf]
  %v142 = vld [vmem:[%s1 + $0x68] sm:$0xf]
  %v143 = vld [vmem:[%s1 + $0x6c] sm:$0xf]
  %v144 = vld [vmem:[%s1 + $0x70] sm:$0xf]
  %v145 = vld [vmem:[%s1 + $0x74] sm:$0xf]
  %v146 = vld [vmem:[%s1 + $0x78] sm:$0xf]
  %v147 = vld [vmem:[%s1 + $0x7c] sm:$0xf]
  %v148 = vld [vmem:[%s1 + $0x80] sm:$0xf]
  %v149 = vld [vmem:[%s1 + $0x84] sm:$0xf]
  %v150 = vld [vmem:[%s1 + $0x88] sm:$0xf]
  %v151 = vld [vmem:[%s1 + $0x8c] sm:$0xf]
  %v152 = vld [vmem:[%s1 + $0x90] sm:$0xf]
  %v153 = vld [vmem:[%s1 + $0x94] sm:$0xf]
  %v154 = vld [vmem:[%s1 + $0x98] sm:$0xf]
  %v155 = vld [vmem:[%s1 + $0x9c] sm:$0xf]
  %v156 = vld [vmem:[%s1 + $0xa0] sm:$0xf]
  %v157 = vld [vmem:[%s1 + $0xa4] sm:$0xf]
  %v158 = vld [vmem:[%s1 + $0xa8] sm:$0xf]
  %v159 = vld [vmem:[%s1 + $0xac] sm:$0xf]
  %v160 = vld [vmem:[%s1 + $0xb0] sm:$0xf]
  %v161 = vld [vmem:[%s1 + $0xb4] sm:$0xf]
  %v162 = vld [vmem:[%s1 + $0xb8] sm:$0xf]
  %v163 = vld [vmem:[%s1 + $0xbc] sm:$0xf]
  %v164 = vld [vmem:[%s1 + $0xc0] sm:$0xf]
  %v165 = vld [vmem:[%s1 + $0xc4] sm:$0xf]
  %v166 = vld [vmem:[%s1 + $0xc8] sm:$0xf]
  %v167 = vld [vmem:[%s1 + $0xcc] sm:$0xf]
  %v168 = vld [vmem:[%s1 + $0xd0] sm:$0xf]
  %v169 = vld [vmem:[%s1 + $0xd4] sm:$0xf]
  %v170 = vld [vmem:[%s1 + $0xd8] sm:$0xf]
  %v171 = vld [vmem:[%s1 + $0xdc] sm:$0xf]
  %v172 = vld [vmem:[%s1 + $0xe0] sm:$0xf]
  %v173 = vld [vmem:[%s1 + $0xe4] sm:$0xf]
  %v174 = vld [vmem:[%s1 + $0xe8] sm:$0xf]
  %v175 = vld [vmem:[%s1 + $0xec] sm:$0xf]
  %v176 = vld [vmem:[%s1 + $0xf0] sm:$0xf]
  %v177 = vld [vmem:[%s1 + $0xf4] sm:$0xf]
  %v178 = vld [vmem:[%s1 + $0xf8] sm:$0xf]
  %v179 = vld [vmem:[%s1 + $0xfc] sm:$0xf]
  %v180 = vld [vmem:[%s1 + $0x100] sm:$0xf]
  %v181 = vld [vmem:[%s1 + $0x104] sm:$0xf]
  %v182 = vld [vmem:[%s1 + $0x108] sm:$0xf]
  %v183 = vld [vmem:[%s1 + $0x10c] sm:$0xf]
  %v184 = vld [vmem:[%s1 + $0x110] sm:$0xf]
  %v185 = vld [vmem:[%s1 + $0x114] sm:$0xf]
  %v186 = vld [vmem:[%s1 + $0x118] sm:$0xf]
  %v187 = vld [vmem:[%s1 + $0x11c] sm:$0xf]
  %v188 = vld [vmem:[%s1 + $0x120] sm:$0xf]
  %v189 = vld [vmem:[%s1 + $0x124] sm:$0xf]
  %v190 = vld [vmem:[%s1 + $0x128] sm:$0xf]
  %v191 = vld [vmem:[%s1 + $0x12c] sm:$0xf]
  %v192 = vld [vmem:[%s1 + $0x130] sm:$0xf]
  %v193 = vld [vmem:[%s1 + $0x134] sm:$0xf]
  %v194 = vld [vmem:[%s1 + $0x138] sm:$0xf]
  %v195 = vld [vmem:[%s1 + $0x13c] sm:$0xf]
  %v196 = vld [vmem:[%s1 + $0x140] sm:$0xf]
  %v197 = vld [vmem:[%s1 + $0x144] sm:$0xf]
  %v198 = vld [vmem:[%s1 + $0x148] sm:$0xf]
  %v199 = vld [vmem:[%s1 + $0x14c] sm:$0xf]
  %v200 = vld [vmem:[%s1 + $0x150] sm:$0xf]
  %v201 = vld [vmem:[%s1 + $0x154] sm:$0xf]
  %v202 = vld [vmem:[%s1 + $0x158] sm:$0xf]
  %v203 = vld [vmem:[%s1 + $0x15c] sm:$0xf]
  %v204 = vld [vmem:[%s1 + $0x160] sm:$0xf]
  %v205 = vld [vmem:[%s1 + $0x164] sm:$0xf]
  %v206 = vld [vmem:[%s1 + $0x168] sm:$0xf]
  %v207 = vld [vmem:[%s1 + $0x16c] sm:$0xf]
  %v208 = vld [vmem:[%s1 + $0x170] sm:$0xf]
  %v209 = vld [vmem:[%s1 + $0x174] sm:$0xf]
  %v210 = vld [vmem:[%s1 + $0x178] sm:$0xf]
  %v211 = vld [vmem:[%s1 + $0x17c] sm:$0xf]
  %v212 = vld [vmem:[%s1 + $0x180] sm:$0xf]
  %v213 = vld [vmem:[%s1 + $0x184] sm:$0xf]
  %v278 = vunpack.c.l.b16 %v52
  %v279 = vunpack.c.h.b16 %v52
  %v280 = vunpack.c.l.b16 %v53
  %v281 = vunpack.c.h.b16 %v53
  %v282 = vunpack.c.l.b16 %v54
  %v283 = vunpack.c.h.b16 %v54
  %v284 = vunpack.c.l.b16 %v55
  %v285 = vunpack.c.l.b16 %v56
  %v286 = vunpack.c.h.b16 %v56
  %v287 = vunpack.c.l.b16 %v57
  %v288 = vunpack.c.h.b16 %v57
  %v289 = vunpack.c.l.b16 %v58
  %v290 = vunpack.c.h.b16 %v58
  %v291 = vunpack.c.l.b16 %v59
  %v292 = vunpack.c.l.b16 %v60
  %v293 = vunpack.c.h.b16 %v60
  %v294 = vunpack.c.l.b16 %v61
  %v295 = vunpack.c.h.b16 %v61
  %v296 = vunpack.c.l.b16 %v62
  %v297 = vunpack.c.h.b16 %v62
  %v298 = vunpack.c.l.b16 %v63
  %v299 = vunpack.c.l.b16 %v64
  %v300 = vunpack.c.h.b16 %v64
  %v301 = vunpack.c.l.b16 %v65
  %v302 = vunpack.c.h.b16 %v65
  %v303 = vunpack.c.l.b16 %v66
  %v304 = vunpack.c.h.b16 %v66
  %v305 = vunpack.c.l.b16 %v67
  %v306 = vunpack.c.l.b16 %v68
  %v307 = vunpack.c.h.b16 %v68
  %v308 = vunpack.c.l.b16 %v69
  %v309 = vunpack.c.h.b16 %v69
  %v310 = vunpack.c.l.b16 %v70
  %v311 = vunpack.c.h.b16 %v70
  %v312 = vunpack.c.l.b16 %v71
  %v313 = vunpack.c.l.b16 %v72
  %v314 = vunpack.c.h.b16 %v72
  %v315 = vunpack.c.l.b16 %v73
  %v316 = vunpack.c.h.b16 %v73
  %v317 = vunpack.c.l.b16 %v74
  %v318 = vunpack.c.h.b16 %v74
  %v319 = vunpack.c.l.b16 %v75
  %v320 = vunpack.c.l.b16 %v76
  %v321 = vunpack.c.h.b16 %v76
  %v322 = vunpack.c.l.b16 %v77
  %v323 = vunpack.c.h.b16 %v77
  %v324 = vunpack.c.l.b16 %v78
  %v325 = vunpack.c.h.b16 %v78
  %v326 = vunpack.c.l.b16 %v79
  %v327 = vunpack.c.l.b16 %v80
  %v328 = vunpack.c.h.b16 %v80
  %v329 = vunpack.c.l.b16 %v81
  %v330 = vunpack.c.h.b16 %v81
  %v331 = vunpack.c.l.b16 %v82
  %v332 = vunpack.c.h.b16 %v82
  %v333 = vunpack.c.l.b16 %v83
  %v334 = vunpack.c.l.b16 %v84
  %v335 = vunpack.c.h.b16 %v84
  %v336 = vunpack.c.l.b16 %v85
  %v337 = vunpack.c.h.b16 %v85
  %v338 = vunpack.c.l.b16 %v86
  %v339 = vunpack.c.h.b16 %v86
  %v340 = vunpack.c.l.b16 %v87
  %v341 = vunpack.c.l.b16 %v88
  %v342 = vunpack.c.h.b16 %v88
  %v343 = vunpack.c.l.b16 %v89
  %v344 = vunpack.c.h.b16 %v89
  %v345 = vunpack.c.l.b16 %v90
  %v346 = vunpack.c.h.b16 %v90
  %v347 = vunpack.c.l.b16 %v91
  %v348 = vunpack.c.l.b16 %v92
  %v349 = vunpack.c.h.b16 %v92
  %v350 = vunpack.c.l.b16 %v93
  %v351 = vunpack.c.h.b16 %v93
  %v352 = vunpack.c.l.b16 %v94
  %v353 = vunpack.c.h.b16 %v94
  %v354 = vunpack.c.l.b16 %v95
  %v355 = vunpack.c.l.b16 %v96
  %v356 = vunpack.c.h.b16 %v96
  %v357 = vunpack.c.l.b16 %v97
  %v358 = vunpack.c.h.b16 %v97
  %v359 = vunpack.c.l.b16 %v98
  %v360 = vunpack.c.h.b16 %v98
  %v361 = vunpack.c.l.b16 %v99
  %v362 = vunpack.c.l.b16 %v100
  %v363 = vunpack.c.h.b16 %v100
  %v364 = vunpack.c.l.b16 %v101
  %v365 = vunpack.c.h.b16 %v101
  %v366 = vunpack.c.l.b16 %v102
  %v367 = vunpack.c.h.b16 %v102
  %v368 = vunpack.c.l.b16 %v103
  %v369 = vunpack.c.l.b16 %v104
  %v370 = vunpack.c.h.b16 %v104
  %v371 = vunpack.c.l.b16 %v105
  %v372 = vunpack.c.h.b16 %v105
  %v373 = vunpack.c.l.b16 %v106
  %v374 = vunpack.c.h.b16 %v106
  %v375 = vunpack.c.l.b16 %v107
  %v376 = vunpack.c.l.b16 %v108
  %v377 = vunpack.c.h.b16 %v108
  %v378 = vunpack.c.l.b16 %v109
  %v379 = vunpack.c.h.b16 %v109
  %v380 = vunpack.c.l.b16 %v110
  %v381 = vunpack.c.h.b16 %v110
  %v382 = vunpack.c.l.b16 %v111
  %v383 = vunpack.c.l.b16 %v112
  %v384 = vunpack.c.h.b16 %v112
  %v385 = vunpack.c.l.b16 %v113
  %v386 = vunpack.c.h.b16 %v113
  %v387 = vunpack.c.l.b16 %v114
  %v388 = vunpack.c.h.b16 %v114
  %v389 = vunpack.c.l.b16 %v115
  %v390 = vpack.c.b16 %v285, %v278
  %v391 = vpack.c.b16 %v286, %v279
  %v392 = vpack.c.b16 %v287, %v280
  %v393 = vpack.c.b16 %v288, %v281
  %v394 = vpack.c.b16 %v289, %v282
  %v395 = vpack.c.b16 %v290, %v283
  %v396 = vpack.c.b16 %v291, %v284
  %v397 = vpack.c.b16 %v299, %v292
  %v398 = vpack.c.b16 %v300, %v293
  %v399 = vpack.c.b16 %v301, %v294
  %v400 = vpack.c.b16 %v302, %v295
  %v401 = vpack.c.b16 %v303, %v296
  %v402 = vpack.c.b16 %v304, %v297
  %v403 = vpack.c.b16 %v305, %v298
  %v404 = vpack.c.b16 %v313, %v306
  %v405 = vpack.c.b16 %v314, %v307
  %v406 = vpack.c.b16 %v315, %v308
  %v407 = vpack.c.b16 %v316, %v309
  %v408 = vpack.c.b16 %v317, %v310
  %v409 = vpack.c.b16 %v318, %v311
  %v410 = vpack.c.b16 %v319, %v312
  %v411 = vpack.c.b16 %v327, %v320
  %v412 = vpack.c.b16 %v328, %v321
  %v413 = vpack.c.b16 %v329, %v322
  %v414 = vpack.c.b16 %v330, %v323
  %v415 = vpack.c.b16 %v331, %v324
  %v416 = vpack.c.b16 %v332, %v325
  %v417 = vpack.c.b16 %v333, %v326
  %v418 = vpack.c.b16 %v341, %v334
  %v419 = vpack.c.b16 %v342, %v335
  %v420 = vpack.c.b16 %v343, %v336
  %v421 = vpack.c.b16 %v344, %v337
  %v422 = vpack.c.b16 %v345, %v338
  %v423 = vpack.c.b16 %v346, %v339
  %v424 = vpack.c.b16 %v347, %v340
  %v425 = vpack.c.b16 %v355, %v348
  %v426 = vpack.c.b16 %v356, %v349
  %v427 = vpack.c.b16 %v357, %v350
  %v428 = vpack.c.b16 %v358, %v351
  %v429 = vpack.c.b16 %v359, %v352
  %v430 = vpack.c.b16 %v360, %v353
  %v431 = vpack.c.b16 %v361, %v354
  %v432 = vpack.c.b16 %v369, %v362
  %v433 = vpack.c.b16 %v370, %v363
  %v434 = vpack.c.b16 %v371, %v364
  %v435 = vpack.c.b16 %v372, %v365
  %v436 = vpack.c.b16 %v373, %v366
  %v437 = vpack.c.b16 %v374, %v367
  %v438 = vpack.c.b16 %v375, %v368
  %v439 = vpack.c.b16 %v383, %v376
  %v440 = vpack.c.b16 %v384, %v377
  %v441 = vpack.c.b16 %v385, %v378
  %v442 = vpack.c.b16 %v386, %v379
  %v443 = vpack.c.b16 %v387, %v380
  %v444 = vpack.c.b16 %v388, %v381
  %v445 = vpack.c.b16 %v389, %v382
  %v592 = vunpack.c.l.b16 %v116
  %v593 = vunpack.c.l.b16 %v117
  %v594 = vunpack.c.l.b16 %v118
  %v595 = vunpack.c.l.b16 %v119
  %v596 = vunpack.c.l.b16 %v120
  %v597 = vunpack.c.l.b16 %v121
  %v598 = vunpack.c.l.b16 %v122
  %v599 = vunpack.c.l.b16 %v123
  %v600 = vunpack.c.l.b16 %v124
  %v601 = vunpack.c.l.b16 %v125
  %v602 = vunpack.c.l.b16 %v126
  %v603 = vunpack.c.l.b16 %v127
  %v604 = vunpack.c.l.b16 %v128
  %v605 = vunpack.c.l.b16 %v129
  %v606 = vunpack.c.l.b16 %v130
  %v607 = vunpack.c.l.b16 %v131
  %v608 = vunpack.c.l.b16 %v132
  %v609 = vunpack.c.l.b16 %v133
  %v610 = vunpack.c.l.b16 %v134
  %v611 = vunpack.c.l.b16 %v135
  %v612 = vunpack.c.l.b16 %v136
  %v613 = vunpack.c.l.b16 %v137
  %v614 = vunpack.c.l.b16 %v138
  %v615 = vunpack.c.l.b16 %v139
  %v616 = vunpack.c.l.b16 %v140
  %v617 = vunpack.c.l.b16 %v141
  %v618 = vunpack.c.l.b16 %v142
  %v619 = vunpack.c.l.b16 %v143
  %v620 = vunpack.c.l.b16 %v144
  %v621 = vunpack.c.l.b16 %v145
  %v622 = vunpack.c.l.b16 %v146
  %v623 = vunpack.c.l.b16 %v147
  %v624 = vunpack.c.l.b16 %v148
  %v625 = vunpack.c.l.b16 %v149
  %v626 = vunpack.c.l.b16 %v150
  %v627 = vunpack.c.l.b16 %v151
  %v628 = vunpack.c.l.b16 %v152
  %v629 = vunpack.c.l.b16 %v153
  %v630 = vunpack.c.l.b16 %v154
  %v631 = vunpack.c.l.b16 %v155
  %v632 = vunpack.c.l.b16 %v156
  %v633 = vunpack.c.l.b16 %v157
  %v634 = vunpack.c.l.b16 %v158
  %v635 = vunpack.c.l.b16 %v159
  %v636 = vunpack.c.l.b16 %v160
  %v637 = vunpack.c.l.b16 %v161
  %v638 = vunpack.c.l.b16 %v162
  %v639 = vunpack.c.l.b16 %v163
  %v640 = vunpack.c.l.b16 %v164
  %v641 = vunpack.c.l.b16 %v165
  %v642 = vunpack.c.l.b16 %v166
  %v643 = vunpack.c.l.b16 %v167
  %v644 = vunpack.c.l.b16 %v168
  %v645 = vunpack.c.l.b16 %v169
  %v646 = vunpack.c.l.b16 %v170
  %v647 = vunpack.c.l.b16 %v171
  %v648 = vunpack.c.l.b16 %v172
  %v649 = vunpack.c.l.b16 %v173
  %v650 = vunpack.c.l.b16 %v174
  %v651 = vunpack.c.l.b16 %v175
  %v652 = vunpack.c.l.b16 %v176
  %v653 = vunpack.c.l.b16 %v177
  %v654 = vunpack.c.l.b16 %v178
  %v655 = vunpack.c.l.b16 %v179
  %v656 = vunpack.c.l.b16 %v180
  %v657 = vunpack.c.l.b16 %v181
  %v658 = vunpack.c.l.b16 %v182
  %v659 = vunpack.c.l.b16 %v183
  %v660 = vunpack.c.l.b16 %v184
  %v661 = vunpack.c.l.b16 %v185
  %v662 = vunpack.c.l.b16 %v186
  %v663 = vunpack.c.l.b16 %v187
  %v664 = vunpack.c.l.b16 %v188
  %v665 = vunpack.c.l.b16 %v189
  %v666 = vunpack.c.l.b16 %v190
  %v667 = vunpack.c.l.b16 %v191
  %v668 = vunpack.c.l.b16 %v192
  %v669 = vunpack.c.l.b16 %v193
  %v670 = vunpack.c.l.b16 %v194
  %v671 = vunpack.c.l.b16 %v195
  %v672 = vunpack.c.l.b16 %v196
  %v673 = vunpack.c.l.b16 %v197
  %v674 = vunpack.c.l.b16 %v198
  %v675 = vunpack.c.l.b16 %v199
  %v676 = vunpack.c.l.b16 %v200
  %v677 = vunpack.c.l.b16 %v201
  %v678 = vunpack.c.l.b16 %v202
  %v679 = vunpack.c.l.b16 %v203
  %v680 = vunpack.c.l.b16 %v204
  %v681 = vunpack.c.l.b16 %v205
  %v682 = vunpack.c.l.b16 %v206
  %v683 = vunpack.c.l.b16 %v207
  %v684 = vunpack.c.l.b16 %v208
  %v685 = vunpack.c.l.b16 %v209
  %v686 = vunpack.c.l.b16 %v210
  %v687 = vunpack.c.l.b16 %v211
  %v688 = vunpack.c.l.b16 %v212
  %v689 = vunpack.c.l.b16 %v213
  %v690 = vpack.c.b16 %v593, %v592
  %v691 = vpack.c.b16 %v595, %v594
  %v692 = vpack.c.b16 %v597, %v596
  %v693 = vpack.c.b16 %v599, %v598
  %v694 = vpack.c.b16 %v601, %v600
  %v695 = vpack.c.b16 %v603, %v602
  %v696 = vpack.c.b16 %v605, %v604
  %v697 = vpack.c.b16 %v607, %v606
  %v698 = vpack.c.b16 %v609, %v608
  %v699 = vpack.c.b16 %v611, %v610
  %v700 = vpack.c.b16 %v613, %v612
  %v701 = vpack.c.b16 %v615, %v614
  %v702 = vpack.c.b16 %v617, %v616
  %v703 = vpack.c.b16 %v619, %v618
  %v704 = vpack.c.b16 %v621, %v620
  %v705 = vpack.c.b16 %v623, %v622
  %v706 = vpack.c.b16 %v625, %v624
  %v707 = vpack.c.b16 %v627, %v626
  %v708 = vpack.c.b16 %v629, %v628
  %v709 = vpack.c.b16 %v631, %v630
  %v710 = vpack.c.b16 %v633, %v632
  %v711 = vpack.c.b16 %v635, %v634
  %v712 = vpack.c.b16 %v637, %v636
  %v713 = vpack.c.b16 %v639, %v638
  %v714 = vpack.c.b16 %v641, %v640
  %v715 = vpack.c.b16 %v643, %v642
  %v716 = vpack.c.b16 %v645, %v644
  %v717 = vpack.c.b16 %v647, %v646
  %v718 = vpack.c.b16 %v649, %v648
  %v719 = vpack.c.b16 %v651, %v650
  %v720 = vpack.c.b16 %v653, %v652
  %v721 = vpack.c.b16 %v655, %v654
  %v722 = vpack.c.b16 %v657, %v656
  %v723 = vpack.c.b16 %v659, %v658
  %v724 = vpack.c.b16 %v661, %v660
  %v725 = vpack.c.b16 %v663, %v662
  %v726 = vpack.c.b16 %v665, %v664
  %v727 = vpack.c.b16 %v667, %v666
  %v728 = vpack.c.b16 %v669, %v668
  %v729 = vpack.c.b16 %v671, %v670
  %v730 = vpack.c.b16 %v673, %v672
  %v731 = vpack.c.b16 %v675, %v674
  %v732 = vpack.c.b16 %v677, %v676
  %v733 = vpack.c.b16 %v679, %v678
  %v734 = vpack.c.b16 %v681, %v680
  %v735 = vpack.c.b16 %v683, %v682
  %v736 = vpack.c.b16 %v685, %v684
  %v737 = vpack.c.b16 %v687, %v686
  %v738 = vpack.c.b16 %v689, %v688
  %vm788 = vcmask 130048
  %v790 = vsel %vm788, %v396, 0
  %v793 = vsel %vm788, %v403, 0
  %v796 = vsel %vm788, %v410, 0
  %v799 = vsel %vm788, %v417, 0
  %v802 = vsel %vm788, %v424, 0
  %v805 = vsel %vm788, %v431, 0
  %v808 = vsel %vm788, %v438, 0
  %v811 = vsel %vm788, %v445, 0
  %813 = vmatprep.subr.bf16.mxu0 0
  %814 = vmatpush1.bf16.msra.mxu0 %v690
  %815 = vmatprep.subr.bf16.mxu0 0
  %816 = vmatpush1.bf16.msra.mxu0 %v691
  %817 = vmatprep.subr.bf16.mxu0 0
  %818 = vmatpush1.bf16.msra.mxu0 %v692
  %819 = vmatprep.subr.bf16.mxu0 0
  %820 = vmatpush1.bf16.msra.mxu0 %v693
  %821 = vmatprep.subr.bf16.mxu0 0
  %822 = vmatpush1.bf16.msra.mxu0 %v694
  %823 = vmatprep.subr.bf16.mxu0 0
  %824 = vmatpush1.bf16.msra.mxu0 %v695
  %825 = vmatprep.subr.bf16.mxu0 0
  %826 = vmatpush1.bf16.msra.mxu0 %v696
  %827 = vmatprep.subr.bf16.mxu0 0
  %828 = vmatpush1.bf16.msra.mxu0 %v697
  %829 = vmatprep.subr.bf16.mxu0 0
  %830 = vmatpush1.bf16.msra.mxu0 %v698
  %831 = vmatprep.subr.bf16.mxu0 0
  %832 = vmatpush1.bf16.msra.mxu0 %v699
  %833 = vmatprep.subr.bf16.mxu0 0
  %834 = vmatpush1.bf16.msra.mxu0 %v700
  %835 = vmatprep.subr.bf16.mxu0 0
  %836 = vmatpush1.bf16.msra.mxu0 %v701
  %837 = vmatprep.subr.bf16.mxu0 0
  %838 = vmatpush1.bf16.msra.mxu0 %v702
  %839 = vmatprep.subr.bf16.mxu0 0
  %840 = vmatpush1.bf16.msra.mxu0 %v703
  %841 = vmatprep.subr.bf16.mxu0 0
  %842 = vmatpush1.bf16.msra.mxu0 %v704
  %843 = vmatprep.subr.bf16.mxu0 0
  %844 = vmatpush1.bf16.msra.mxu0 %v705
  %845 = vmatprep.mubr.bf16.mxu0 %v391
  %846 = vmatmul.mubr.bf16.gmra.mrb[0].mxu0 %v390
  %v847 = vpop.f32.mrb[0].mxu0
  %v848 = vadd.f32 0.0, %v847
  %v849 = vpop.f32.mrb[0].mxu0
  %v850 = vpop.f32.mrb[0].mxu0
  %v851 = vadd.f32 0.0, %v850
  %v852 = vpop.f32.mrb[0].mxu0
  %853 = vmatprep.mubr.bf16.mxu0 %v398
  %854 = vmatmul.mubr.bf16.gmra.mrb[0].mxu0 %v397
  %v855 = vpop.f32.mrb[0].mxu0
  %v856 = vadd.f32 0.0, %v855
  %v857 = vpop.f32.mrb[0].mxu0
  %v858 = vpop.f32.mrb[0].mxu0
  %v859 = vadd.f32 0.0, %v858
  %v860 = vpop.f32.mrb[0].mxu0
  %861 = vmatprep.mubr.bf16.mxu0 %v405
  %862 = vmatmul.mubr.bf16.gmra.mrb[0].mxu0 %v404
  %v863 = vpop.f32.mrb[0].mxu0
  %v864 = vadd.f32 0.0, %v863
  %v865 = vpop.f32.mrb[0].mxu0
  %v866 = vpop.f32.mrb[0].mxu0
  %v867 = vadd.f32 0.0, %v866
  %v868 = vpop.f32.mrb[0].mxu0
  %869 = vmatprep.mubr.bf16.mxu0 %v412
  %870 = vmatmul.mubr.bf16.gmra.mrb[0].mxu0 %v411
  %v871 = vpop.f32.mrb[0].mxu0
  %v872 = vadd.f32 0.0, %v871
  %v873 = vpop.f32.mrb[0].mxu0
  %v874 = vpop.f32.mrb[0].mxu0
  %v875 = vadd.f32 0.0, %v874
  %v876 = vpop.f32.mrb[0].mxu0
  %877 = vmatprep.mubr.bf16.mxu0 %v419
  %878 = vmatmul.mubr.bf16.gmra.mrb[0].mxu0 %v418
  %v879 = vpop.f32.mrb[0].mxu0
  %v880 = vadd.f32 0.0, %v879
  %v881 = vpop.f32.mrb[0].mxu0
  %v882 = vpop.f32.mrb[0].mxu0
  %v883 = vadd.f32 0.0, %v882
  %v884 = vpop.f32.mrb[0].mxu0
  %885 = vmatprep.mubr.bf16.mxu0 %v426
  %886 = vmatmul.mubr.bf16.gmra.mrb[0].mxu0 %v425
  %v887 = vpop.f32.mrb[0].mxu0
  %v888 = vadd.f32 0.0, %v887
  %v889 = vpop.f32.mrb[0].mxu0
  %v890 = vpop.f32.mrb[0].mxu0
  %v891 = vadd.f32 0.0, %v890
  %v892 = vpop.f32.mrb[0].mxu0
  %893 = vmatprep.mubr.bf16.mxu0 %v433
  %894 = vmatmul.mubr.bf16.gmra.mrb[0].mxu0 %v432
  %v895 = vpop.f32.mrb[0].mxu0
  %v896 = vadd.f32 0.0, %v895
  %v897 = vpop.f32.mrb[0].mxu0
  %v898 = vpop.f32.mrb[0].mxu0
  %v899 = vadd.f32 0.0, %v898
  %v900 = vpop.f32.mrb[0].mxu0
  %901 = vmatprep.mubr.bf16.mxu0 %v440
  %902 = vmatmul.mubr.bf16.gmra.mrb[0].mxu0 %v439
  %v903 = vpop.f32.mrb[0].mxu0
  %v904 = vadd.f32 0.0, %v903
  %v905 = vpop.f32.mrb[0].mxu0
  %v906 = vpop.f32.mrb[0].mxu0
  %v907 = vadd.f32 0.0, %v906
  %v908 = vpop.f32.mrb[0].mxu0
  %909 = vdwg.mxu0
  %910 = vmatprep.subr.bf16.mxu0 0
  %911 = vmatpush1.bf16.msra.mxu0 %v706
  %912 = vmatprep.subr.bf16.mxu0 0
  %913 = vmatpush1.bf16.msra.mxu0 %v707
  %914 = vmatprep.subr.bf16.mxu0 0
  %915 = vmatpush1.bf16.msra.mxu0 %v708
  %916 = vmatprep.subr.bf16.mxu0 0
  %917 = vmatpush1.bf16.msra.mxu0 %v709
  %918 = vmatprep.subr.bf16.mxu0 0
  %919 = vmatpush1.bf16.msra.mxu0 %v710
  %920 = vmatprep.subr.bf16.mxu0 0
  %921 = vmatpush1.bf16.msra.mxu0 %v711
  %922 = vmatprep.subr.bf16.mxu0 0
  %923 = vmatpush1.bf16.msra.mxu0 %v712
  %924 = vmatprep.subr.bf16.mxu0 0
  %925 = vmatpush1.bf16.msra.mxu0 %v713
  %926 = vmatprep.subr.bf16.mxu0 0
  %927 = vmatpush1.bf16.msra.mxu0 %v714
  %928 = vmatprep.subr.bf16.mxu0 0
  %929 = vmatpush1.bf16.msra.mxu0 %v715
  %930 = vmatprep.subr.bf16.mxu0 0
  %931 = vmatpush1.bf16.msra.mxu0 %v716
  %932 = vmatprep.subr.bf16.mxu0 0
  %933 = vmatpush1.bf16.msra.mxu0 %v717
  %934 = vmatprep.subr.bf16.mxu0 0
  %935 = vmatpush1.bf16.msra.mxu0 %v718
  %936 = vmatprep.subr.bf16.mxu0 0
  %937 = vmatpush1.bf16.msra.mxu0 %v719
  %938 = vmatprep.subr.bf16.mxu0 0
  %939 = vmatpush1.bf16.msra.mxu0 %v720
  %940 = vmatprep.subr.bf16.mxu0 0
  %941 = vmatpush1.bf16.msra.mxu0 %v721
  %942 = vmatprep.mubr.bf16.mxu0 %v393
  %943 = vmatmul.mubr.bf16.gmra.mrb[0].mxu0 %v392
  %v944 = vpop.f32.mrb[0].mxu0
  %v945 = vadd.f32 %v848, %v944
  %v946 = vpop.f32.mrb[0].mxu0
  %v947 = vpop.f32.mrb[0].mxu0
  %v948 = vadd.f32 %v851, %v947
  %v949 = vpop.f32.mrb[0].mxu0
  %950 = vmatprep.mubr.bf16.mxu0 %v400
  %951 = vmatmul.mubr.bf16.gmra.mrb[0].mxu0 %v399
  %v952 = vpop.f32.mrb[0].mxu0
  %v953 = vadd.f32 %v856, %v952
  %v954 = vpop.f32.mrb[0].mxu0
  %v955 = vpop.f32.mrb[0].mxu0
  %v956 = vadd.f32 %v859, %v955
  %v957 = vpop.f32.mrb[0].mxu0
  %958 = vmatprep.mubr.bf16.mxu0 %v407
  %959 = vmatmul.mubr.bf16.gmra.mrb[0].mxu0 %v406
  %v960 = vpop.f32.mrb[0].mxu0
  %v961 = vadd.f32 %v864, %v960
  %v962 = vpop.f32.mrb[0].mxu0
  %v963 = vpop.f32.mrb[0].mxu0
  %v964 = vadd.f32 %v867, %v963
  %v965 = vpop.f32.mrb[0].mxu0
  %966 = vmatprep.mubr.bf16.mxu0 %v414
  %967 = vmatmul.mubr.bf16.gmra.mrb[0].mxu0 %v413
  %v968 = vpop.f32.mrb[0].mxu0
  %v969 = vadd.f32 %v872, %v968
  %v970 = vpop.f32.mrb[0].mxu0
  %v971 = vpop.f32.mrb[0].mxu0
  %v972 = vadd.f32 %v875, %v971
  %v973 = vpop.f32.mrb[0].mxu0
  %974 = vmatprep.mubr.bf16.mxu0 %v421
  %975 = vmatmul.mubr.bf16.gmra.mrb[0].mxu0 %v420
  %v976 = vpop.f32.mrb[0].mxu0
  %v977 = vadd.f32 %v880, %v976
  %v978 = vpop.f32.mrb[0].mxu0
  %v979 = vpop.f32.mrb[0].mxu0
  %v980 = vadd.f32 %v883, %v979
  %v981 = vpop.f32.mrb[0].mxu0
  %982 = vmatprep.mubr.bf16.mxu0 %v428
  %983 = vmatmul.mubr.bf16.gmra.mrb[0].mxu0 %v427
  %v984 = vpop.f32.mrb[0].mxu0
  %v985 = vadd.f32 %v888, %v984
  %v986 = vpop.f32.mrb[0].mxu0
  %v987 = vpop.f32.mrb[0].mxu0
  %v988 = vadd.f32 %v891, %v987
  %v989 = vpop.f32.mrb[0].mxu0
  %990 = vmatprep.mubr.bf16.mxu0 %v435
  %991 = vmatmul.mubr.bf16.gmra.mrb[0].mxu0 %v434
  %v992 = vpop.f32.mrb[0].mxu0
  %v993 = vadd.f32 %v896, %v992
  %v994 = vpop.f32.mrb[0].mxu0
  %v995 = vpop.f32.mrb[0].mxu0
  %v996 = vadd.f32 %v899, %v995
  %v997 = vpop.f32.mrb[0].mxu0
  %998 = vmatprep.mubr.bf16.mxu0 %v442
  %999 = vmatmul.mubr.bf16.gmra.mrb[0].mxu0 %v441
  %v1000 = vpop.f32.mrb[0].mxu0
  %v1001 = vadd.f32 %v904, %v1000
  %v1002 = vpop.f32.mrb[0].mxu0
  %v1003 = vpop.f32.mrb[0].mxu0
  %v1004 = vadd.f32 %v907, %v1003
  %v1005 = vpop.f32.mrb[0].mxu0
  %1006 = vdwg.mxu0
  %1007 = vmatprep.subr.bf16.mxu0 0
  %1008 = vmatpush1.bf16.msra.mxu0 %v722
  %1009 = vmatprep.subr.bf16.mxu0 0
  %1010 = vmatpush1.bf16.msra.mxu0 %v723
  %1011 = vmatprep.subr.bf16.mxu0 0
  %1012 = vmatpush1.bf16.msra.mxu0 %v724
  %1013 = vmatprep.subr.bf16.mxu0 0
  %1014 = vmatpush1.bf16.msra.mxu0 %v725
  %1015 = vmatprep.subr.bf16.mxu0 0
  %1016 = vmatpush1.bf16.msra.mxu0 %v726
  %1017 = vmatprep.subr.bf16.mxu0 0
  %1018 = vmatpush1.bf16.msra.mxu0 %v727
  %1019 = vmatprep.subr.bf16.mxu0 0
  %1020 = vmatpush1.bf16.msra.mxu0 %v728
  %1021 = vmatprep.subr.bf16.mxu0 0
  %1022 = vmatpush1.bf16.msra.mxu0 %v729
  %1023 = vmatprep.subr.bf16.mxu0 0
  %1024 = vmatpush1.bf16.msra.mxu0 %v730
  %1025 = vmatprep.subr.bf16.mxu0 0
  %1026 = vmatpush1.bf16.msra.mxu0 %v731
  %1027 = vmatprep.subr.bf16.mxu0 0
  %1028 = vmatpush1.bf16.msra.mxu0 %v732
  %1029 = vmatprep.subr.bf16.mxu0 0
  %1030 = vmatpush1.bf16.msra.mxu0 %v733
  %1031 = vmatprep.subr.bf16.mxu0 0
  %1032 = vmatpush1.bf16.msra.mxu0 %v734
  %1033 = vmatprep.subr.bf16.mxu0 0
  %1034 = vmatpush1.bf16.msra.mxu0 %v735
  %1035 = vmatprep.subr.bf16.mxu0 0
  %1036 = vmatpush1.bf16.msra.mxu0 %v736
  %1037 = vmatprep.subr.bf16.mxu0 0
  %1038 = vmatpush1.bf16.msra.mxu0 %v737
  %1039 = vmatprep.mubr.bf16.mxu0 %v395
  %1040 = vmatmul.mubr.bf16.gmra.mrb[0].mxu0 %v394
  %v1041 = vpop.f32.mrb[0].mxu0
  %v1042 = vadd.f32 %v945, %v1041
  %v1043 = vpop.f32.mrb[0].mxu0
  %v1044 = vpop.f32.mrb[0].mxu0
  %v1045 = vadd.f32 %v948, %v1044
  %v1046 = vpop.f32.mrb[0].mxu0
  %1047 = vmatprep.mubr.bf16.mxu0 %v402
  %1048 = vmatmul.mubr.bf16.gmra.mrb[0].mxu0 %v401
  %v1049 = vpop.f32.mrb[0].mxu0
  %v1050 = vadd.f32 %v953, %v1049
  %v1051 = vpop.f32.mrb[0].mxu0
  %v1052 = vpop.f32.mrb[0].mxu0
  %v1053 = vadd.f32 %v956, %v1052
  %v1054 = vpop.f32.mrb[0].mxu0
  %1055 = vmatprep.mubr.bf16.mxu0 %v409
  %1056 = vmatmul.mubr.bf16.gmra.mrb[0].mxu0 %v408
  %v1057 = vpop.f32.mrb[0].mxu0
  %v1058 = vadd.f32 %v961, %v1057
  %v1059 = vpop.f32.mrb[0].mxu0
  %v1060 = vpop.f32.mrb[0].mxu0
  %v1061 = vadd.f32 %v964, %v1060
  %v1062 = vpop.f32.mrb[0].mxu0
  %1063 = vmatprep.mubr.bf16.mxu0 %v416
  %1064 = vmatmul.mubr.bf16.gmra.mrb[0].mxu0 %v415
  %v1065 = vpop.f32.mrb[0].mxu0
  %v1066 = vadd.f32 %v969, %v1065
  %v1067 = vpop.f32.mrb[0].mxu0
  %v1068 = vpop.f32.mrb[0].mxu0
  %v1069 = vadd.f32 %v972, %v1068
  %v1070 = vpop.f32.mrb[0].mxu0
  %1071 = vmatprep.mubr.bf16.mxu0 %v423
  %1072 = vmatmul.mubr.bf16.gmra.mrb[0].mxu0 %v422
  %v1073 = vpop.f32.mrb[0].mxu0
  %v1074 = vadd.f32 %v977, %v1073
  %v1075 = vpop.f32.mrb[0].mxu0
  %v1076 = vpop.f32.mrb[0].mxu0
  %v1077 = vadd.f32 %v980, %v1076
  %v1078 = vpop.f32.mrb[0].mxu0
  %1079 = vmatprep.mubr.bf16.mxu0 %v430
  %1080 = vmatmul.mubr.bf16.gmra.mrb[0].mxu0 %v429
  %v1081 = vpop.f32.mrb[0].mxu0
  %v1082 = vadd.f32 %v985, %v1081
  %v1083 = vpop.f32.mrb[0].mxu0
  %v1084 = vpop.f32.mrb[0].mxu0
  %v1085 = vadd.f32 %v988, %v1084
  %v1086 = vpop.f32.mrb[0].mxu0
  %1087 = vmatprep.mubr.bf16.mxu0 %v437
  %1088 = vmatmul.mubr.bf16.gmra.mrb[0].mxu0 %v436
  %v1089 = vpop.f32.mrb[0].mxu0
  %v1090 = vadd.f32 %v993, %v1089
  %v1091 = vpop.f32.mrb[0].mxu0
  %v1092 = vpop.f32.mrb[0].mxu0
  %v1093 = vadd.f32 %v996, %v1092
  %v1094 = vpop.f32.mrb[0].mxu0
  %1095 = vmatprep.mubr.bf16.mxu0 %v444
  %1096 = vmatmul.mubr.bf16.gmra.mrb[0].mxu0 %v443
  %v1097 = vpop.f32.mrb[0].mxu0
  %v1098 = vadd.f32 %v1001, %v1097
  %v1099 = vpop.f32.mrb[0].mxu0
  %v1100 = vpop.f32.mrb[0].mxu0
  %v1101 = vadd.f32 %v1004, %v1100
  %v1102 = vpop.f32.mrb[0].mxu0
  %1103 = vdwg.mxu0
  %1104 = vmatprep.subr.bf16.mxu0 0
  %1105 = vmatpush1.bf16.msra.mxu0 %v738
  %1106 = vmatprep.subr.bf16.mxu0 0
  %1107 = vmatpush1.bf16.msra.mxu0 0
  %1108 = vmatprep.subr.bf16.mxu0 0
  %1109 = vmatpush1.bf16.msra.mxu0 0
  %1110 = vmatprep.subr.bf16.mxu0 0
  %1111 = vmatpush1.bf16.msra.mxu0 0
  %1112 = vmatprep.subr.bf16.mxu0 0
  %1113 = vmatpush1.bf16.msra.mxu0 0
  %1114 = vmatprep.subr.bf16.mxu0 0
  %1115 = vmatpush1.bf16.msra.mxu0 0
  %1116 = vmatprep.subr.bf16.mxu0 0
  %1117 = vmatpush1.bf16.msra.mxu0 0
  %1118 = vmatprep.subr.bf16.mxu0 0
  %1119 = vmatpush1.bf16.msra.mxu0 0
  %1120 = vmatprep.subr.bf16.mxu0 0
  %1121 = vmatpush1.bf16.msra.mxu0 0
  %1122 = vmatprep.subr.bf16.mxu0 0
  %1123 = vmatpush1.bf16.msra.mxu0 0
  %1124 = vmatprep.subr.bf16.mxu0 0
  %1125 = vmatpush1.bf16.msra.mxu0 0
  %1126 = vmatprep.subr.bf16.mxu0 0
  %1127 = vmatpush1.bf16.msra.mxu0 0
  %1128 = vmatprep.subr.bf16.mxu0 0
  %1129 = vmatpush1.bf16.msra.mxu0 0
  %1130 = vmatprep.subr.bf16.mxu0 0
  %1131 = vmatpush1.bf16.msra.mxu0 0
  %1132 = vmatprep.subr.bf16.mxu0 0
  %1133 = vmatpush1.bf16.msra.mxu0 0
  %1134 = vmatprep.subr.bf16.mxu0 0
  %1135 = vmatpush1.bf16.msra.mxu0 0
  %1136 = vmatprep.mubr.bf16.mxu0 0
  %1137 = vmatmul.mubr.bf16.gmra.mrb[0].mxu0 %v790
  %v1138 = vpop.f32.mrb[0].mxu0
  %v1139 = vadd.f32 %v1042, %v1138
  %v1140 = vpop.f32.mrb[0].mxu0
  %v1141 = vpop.f32.mrb[0].mxu0
  %v1142 = vadd.f32 %v1045, %v1141
  %v1143 = vpop.f32.mrb[0].mxu0
  %1144 = vmatprep.mubr.bf16.mxu0 0
  %1145 = vmatmul.mubr.bf16.gmra.mrb[0].mxu0 %v793
  %v1146 = vpop.f32.mrb[0].mxu0
  %v1147 = vadd.f32 %v1050, %v1146
  %v1148 = vpop.f32.mrb[0].mxu0
  %v1149 = vpop.f32.mrb[0].mxu0
  %v1150 = vadd.f32 %v1053, %v1149
  %v1151 = vpop.f32.mrb[0].mxu0
  %1152 = vmatprep.mubr.bf16.mxu0 0
  %1153 = vmatmul.mubr.bf16.gmra.mrb[0].mxu0 %v796
  %v1154 = vpop.f32.mrb[0].mxu0
  %v1155 = vadd.f32 %v1058, %v1154
  %v1156 = vpop.f32.mrb[0].mxu0
  %v1157 = vpop.f32.mrb[0].mxu0
  %v1158 = vadd.f32 %v1061, %v1157
  %v1159 = vpop.f32.mrb[0].mxu0
  %1160 = vmatprep.mubr.bf16.mxu0 0
  %1161 = vmatmul.mubr.bf16.gmra.mrb[0].mxu0 %v799
  %v1162 = vpop.f32.mrb[0].mxu0
  %v1163 = vadd.f32 %v1066, %v1162
  %v1164 = vpop.f32.mrb[0].mxu0
  %v1165 = vpop.f32.mrb[0].mxu0
  %v1166 = vadd.f32 %v1069, %v1165
  %v1167 = vpop.f32.mrb[0].mxu0
  %1168 = vmatprep.mubr.bf16.mxu0 0
  %1169 = vmatmul.mubr.bf16.gmra.mrb[0].mxu0 %v802
  %v1170 = vpop.f32.mrb[0].mxu0
  %v1171 = vadd.f32 %v1074, %v1170
  %v1172 = vpop.f32.mrb[0].mxu0
  %v1173 = vpop.f32.mrb[0].mxu0
  %v1174 = vadd.f32 %v1077, %v1173
  %v1175 = vpop.f32.mrb[0].mxu0
  %1176 = vmatprep.mubr.bf16.mxu0 0
  %1177 = vmatmul.mubr.bf16.gmra.mrb[0].mxu0 %v805
  %v1178 = vpop.f32.mrb[0].mxu0
  %v1179 = vadd.f32 %v1082, %v1178
  %v1180 = vpop.f32.mrb[0].mxu0
  %v1181 = vpop.f32.mrb[0].mxu0
  %v1182 = vadd.f32 %v1085, %v1181
  %v1183 = vpop.f32.mrb[0].mxu0
  %1184 = vmatprep.mubr.bf16.mxu0 0
  %1185 = vmatmul.mubr.bf16.gmra.mrb[0].mxu0 %v808
  %v1186 = vpop.f32.mrb[0].mxu0
  %v1187 = vadd.f32 %v1090, %v1186
  %v1188 = vpop.f32.mrb[0].mxu0
  %v1189 = vpop.f32.mrb[0].mxu0
  %v1190 = vadd.f32 %v1093, %v1189
  %v1191 = vpop.f32.mrb[0].mxu0
  %1192 = vmatprep.mubr.bf16.mxu0 0
  %1193 = vmatmul.mubr.bf16.gmra.mrb[0].mxu0 %v811
  %v1194 = vpop.f32.mrb[0].mxu0
  %v1195 = vadd.f32 %v1098, %v1194
  %v1196 = vpop.f32.mrb[0].mxu0
  %v1197 = vpop.f32.mrb[0].mxu0
  %v1198 = vadd.f32 %v1101, %v1197
  %v1199 = vpop.f32.mrb[0].mxu0
  %1200 = vdwg.mxu0
  %v1201 = vadd.f32 %v36, %v1139
  %v1202 = vadd.f32 %v37, %v1142
  %v1203 = vadd.f32 %v38, %v1147
  %v1204 = vadd.f32 %v39, %v1150
  %v1205 = vadd.f32 %v40, %v1155
  %v1206 = vadd.f32 %v41, %v1158
  %v1207 = vadd.f32 %v42, %v1163
  %v1208 = vadd.f32 %v43, %v1166
  %v1209 = vadd.f32 %v44, %v1171
  %v1210 = vadd.f32 %v45, %v1174
  %v1211 = vadd.f32 %v46, %v1179
  %v1212 = vadd.f32 %v47, %v1182
  %v1213 = vadd.f32 %v48, %v1187
  %v1214 = vadd.f32 %v49, %v1190
  %v1215 = vadd.f32 %v50, %v1195
  %v1216 = vadd.f32 %v51, %v1198
  %vm1217 = vcmask 523264
  %1218 = vst.msk [vmem:[#allocation2] sm:$0xff] %vm1217, %v1201
  %1219 = vst.msk [vmem:[#allocation2 + $0x8] sm:$0xff] %vm1217, %v1202
  %1220 = vst.msk [vmem:[#allocation2 + $0x10] sm:$0xff] %vm1217, %v1203
  %1221 = vst.msk [vmem:[#allocation2 + $0x18] sm:$0xff] %vm1217, %v1204
  %1222 = vst.msk [vmem:[#allocation2 + $0x20] sm:$0xff] %vm1217, %v1205
  %1223 = vst.msk [vmem:[#allocation2 + $0x28] sm:$0xff] %vm1217, %v1206
  %1224 = vst.msk [vmem:[#allocation2 + $0x30] sm:$0xff] %vm1217, %v1207
  %1225 = vst.msk [vmem:[#allocation2 + $0x38] sm:$0xff] %vm1217, %v1208
  %1226 = vst.msk [vmem:[#allocation2 + $0x40] sm:$0xff] %vm1217, %v1209
  %1227 = vst.msk [vmem:[#allocation2 + $0x48] sm:$0xff] %vm1217, %v1210
  %1228 = vst.msk [vmem:[#allocation2 + $0x50] sm:$0xff] %vm1217, %v1211
  %1229 = vst.msk [vmem:[#allocation2 + $0x58] sm:$0xff] %vm1217, %v1212
  %1230 = vst.msk [vmem:[#allocation2 + $0x60] sm:$0xff] %vm1217, %v1213
  %1231 = vst.msk [vmem:[#allocation2 + $0x68] sm:$0xff] %vm1217, %v1214
  %1232 = vst.msk [vmem:[#allocation2 + $0x70] sm:$0xff] %vm1217, %v1215
  %1233 = vst.msk [vmem:[#allocation2 + $0x78] sm:$0xff] %vm1217, %v1216
  // Predicated region
  $region18: #{tpu_custom_call.1} parent=0 // pred_check
    %p1234 = pneg %p15
  $region19: #{tpu_custom_call.1} parent=0 // pred_check_branch
    %1236 = sbr.rel (%p1234) target = $region21
  $region20: #{tpu_custom_call.1} parent=0 // pred_region
    %v1237 = vld [vmem:[#allocation2] sm:$0xff]
    %v1238 = vld [vmem:[#allocation2 + $0x8] sm:$0xff]
    %v1239 = vld [vmem:[#allocation2 + $0x10] sm:$0xff]
    %v1240 = vld [vmem:[#allocation2 + $0x18] sm:$0xff]
    %v1241 = vld [vmem:[#allocation2 + $0x20] sm:$0xff]
    %v1242 = vld [vmem:[#allocation2 + $0x28] sm:$0xff]
    %v1243 = vld [vmem:[#allocation2 + $0x30] sm:$0xff]
    %v1244 = vld [vmem:[#allocation2 + $0x38] sm:$0xff]
    %v1245 = vld [vmem:[#allocation2 + $0x40] sm:$0xff]
    %v1246 = vld [vmem:[#allocation2 + $0x48] sm:$0xff]
    %v1247 = vld [vmem:[#allocation2 + $0x50] sm:$0xff]
    %v1248 = vld [vmem:[#allocation2 + $0x58] sm:$0xff]
    %v1249 = vld [vmem:[#allocation2 + $0x60] sm:$0xff]
    %v1250 = vld [vmem:[#allocation2 + $0x68] sm:$0xff]
    %v1251 = vld [vmem:[#allocation2 + $0x70] sm:$0xff]
    %v1252 = vld [vmem:[#allocation2 + $0x78] sm:$0xff]
    %v1253 = vld [vmem:[%s2] sm:$0x1]
    %v1255 = vlaneseq
    %v1256 = vshrl.u32 %v1255, 7
    %v1257 = vsub.s32 0, %v1256
    %v1258 = vrot.slane %v1253, %v1257
    %v1260 = vadd.f32 %v1237, %v1258
    %v1261 = vadd.f32 %v1238, %v1258
    %v1262 = vadd.f32 %v1239, %v1258
    %v1263 = vadd.f32 %v1240, %v1258
    %v1264 = vadd.f32 %v1241, %v1258
    %v1265 = vadd.f32 %v1242, %v1258
    %v1266 = vadd.f32 %v1243, %v1258
    %v1267 = vadd.f32 %v1244, %v1258
    %v1268 = vadd.f32 %v1245, %v1258
    %v1269 = vadd.f32 %v1246, %v1258
    %v1270 = vadd.f32 %v1247, %v1258
    %v1271 = vadd.f32 %v1248, %v1258
    %v1272 = vadd.f32 %v1249, %v1258
    %v1273 = vadd.f32 %v1250, %v1258
    %v1274 = vadd.f32 %v1251, %v1258
    %v1275 = vadd.f32 %v1252, %v1258
    %v1276 = vmax.f32 %v1260, 0.0
    %v1277 = vmax.f32 %v1261, 0.0
    %v1278 = vmax.f32 %v1262, 0.0
    %v1279 = vmax.f32 %v1263, 0.0
    %v1280 = vmax.f32 %v1264, 0.0
    %v1281 = vmax.f32 %v1265, 0.0
    %v1282 = vmax.f32 %v1266, 0.0
    %v1283 = vmax.f32 %v1267, 0.0
    %v1284 = vmax.f32 %v1268, 0.0
    %v1285 = vmax.f32 %v1269, 0.0
    %v1286 = vmax.f32 %v1270, 0.0
    %v1287 = vmax.f32 %v1271, 0.0
    %v1288 = vmax.f32 %v1272, 0.0
    %v1289 = vmax.f32 %v1273, 0.0
    %v1290 = vmax.f32 %v1274, 0.0
    %v1291 = vmax.f32 %v1275, 0.0
    %v1292 = vpack.c.bf16 %v1277, %v1276
    %v1293 = vpack.c.bf16 %v1279, %v1278
    %v1294 = vpack.c.bf16 %v1281, %v1280
    %v1295 = vpack.c.bf16 %v1283, %v1282
    %v1296 = vpack.c.bf16 %v1285, %v1284
    %v1297 = vpack.c.bf16 %v1287, %v1286
    %v1298 = vpack.c.bf16 %v1289, %v1288
    %v1299 = vpack.c.bf16 %v1291, %v1290
    %v1308 = vunpack.c.l.b16 %v1292
    %v1309 = vunpack.c.h.b16 %v1292
    %v1310 = vunpack.c.l.b16 %v1293
    %v1311 = vunpack.c.h.b16 %v1293
    %v1312 = vunpack.c.l.b16 %v1294
    %v1313 = vunpack.c.h.b16 %v1294
    %v1314 = vunpack.c.l.b16 %v1295
    %v1315 = vunpack.c.h.b16 %v1295
    %v1316 = vunpack.c.l.b16 %v1296
    %v1317 = vunpack.c.h.b16 %v1296
    %v1318 = vunpack.c.l.b16 %v1297
    %v1319 = vunpack.c.h.b16 %v1297
    %v1320 = vunpack.c.l.b16 %v1298
    %v1321 = vunpack.c.h.b16 %v1298
    %v1322 = vunpack.c.l.b16 %v1299
    %v1323 = vunpack.c.h.b16 %v1299
    %v1324 = vpack.c.b16 %v1308, %v1308
    %v1325 = vpack.c.b16 %v1309, %v1309
    %v1326 = vpack.c.b16 %v1310, %v1310
    %v1327 = vpack.c.b16 %v1311, %v1311
    %v1328 = vpack.c.b16 %v1312, %v1312
    %v1329 = vpack.c.b16 %v1313, %v1313
    %v1330 = vpack.c.b16 %v1314, %v1314
    %v1331 = vpack.c.b16 %v1315, %v1315
    %v1332 = vpack.c.b16 %v1316, %v1316
    %v1333 = vpack.c.b16 %v1317, %v1317
    %v1334 = vpack.c.b16 %v1318, %v1318
    %v1335 = vpack.c.b16 %v1319, %v1319
    %v1336 = vpack.c.b16 %v1320, %v1320
    %v1337 = vpack.c.b16 %v1321, %v1321
    %v1338 = vpack.c.b16 %v1322, %v1322
    %v1339 = vpack.c.b16 %v1323, %v1323
    %vm1356 = vcmask 519168
    %1357 = vst.msk [vmem:[%s3] sm:$0xf] %vm1356, %v1324
    %1358 = vst.msk [vmem:[%s3 + $0x4] sm:$0xf] %vm1356, %v1325
    %1359 = vst.msk [vmem:[%s3 + $0x8] sm:$0xf] %vm1356, %v1326
    %1360 = vst.msk [vmem:[%s3 + $0xc] sm:$0xf] %vm1356, %v1327
    %1361 = vst.msk [vmem:[%s3 + $0x10] sm:$0xf] %vm1356, %v1328
    %1362 = vst.msk [vmem:[%s3 + $0x14] sm:$0xf] %vm1356, %v1329
    %1363 = vst.msk [vmem:[%s3 + $0x18] sm:$0xf] %vm1356, %v1330
    %1364 = vst.msk [vmem:[%s3 + $0x1c] sm:$0xf] %vm1356, %v1331
    %1365 = vst.msk [vmem:[%s3 + $0x20] sm:$0xf] %vm1356, %v1332
    %1366 = vst.msk [vmem:[%s3 + $0x24] sm:$0xf] %vm1356, %v1333
    %1367 = vst.msk [vmem:[%s3 + $0x28] sm:$0xf] %vm1356, %v1334
    %1368 = vst.msk [vmem:[%s3 + $0x2c] sm:$0xf] %vm1356, %v1335
    %1369 = vst.msk [vmem:[%s3 + $0x30] sm:$0xf] %vm1356, %v1336
    %1370 = vst.msk [vmem:[%s3 + $0x34] sm:$0xf] %vm1356, %v1337
    %1371 = vst.msk [vmem:[%s3 + $0x38] sm:$0xf] %vm1356, %v1338
    %1372 = vst.msk [vmem:[%s3 + $0x3c] sm:$0xf] %vm1356, %v1339
  $region21: #{tpu_custom_call.1} parent=0 // pred_fallthru
    _
  // Predicated region
  $region22: #{tpu_custom_call.1} parent=0 // pred_check
    _
  $region23: #{tpu_custom_call.1} parent=0 // pred_check_branch
    %1374 = sbr.rel (0) target = $region25
  $region24: #{tpu_custom_call.1} parent=0 // pred_region
    _
  $region25: #{tpu_custom_call.1} parent=0 // pred_fallthru
    _
  // Predicated region
  $region26: #{tpu_custom_call.1} parent=0 // pred_check
    _
  $region27: #{tpu_custom_call.1} parent=0 // pred_check_branch
    %1376 = sbr.rel (0) target = $region29
  $region28: #{tpu_custom_call.1} parent=0 // pred_region
    _
  $region29: #{tpu_custom_call.1} parent=0 // pred_fallthru
    _

</llo_original>
